<compile_context>
chip_gen: v7x
topology: tpu7x:2x2x1
jax: 0.10.0
libtpu: 0.0.40
codegen_flags: <defaults>
</compile_context>

<pallas_src>
import functools
import math

import jax
import jax.numpy as jnp
from jax import lax
from jax.experimental import pallas as pl
from jax.experimental.pallas import tpu as pltpu


# ----------------------------------------------------------------------------
# helpers
# ----------------------------------------------------------------------------
def _gelu_exact(x):
    # torch.nn.GELU() default: 0.5 * x * (1 + erf(x / sqrt(2)))
    return 0.5 * x * (1.0 + lax.erf(x * (1.0 / math.sqrt(2.0))))


def _round_up(v, m):
    return ((v + m - 1) // m) * m


def _pad2(x, rows, cols):
    return jnp.pad(x, ((0, rows - x.shape[0]), (0, cols - x.shape[1])))


# ----------------------------------------------------------------------------
# kernel 1: per-node pipeline
#   h0 = x_aug @ Win_aug          (levels folded into x_aug / Win_aug)
#   m  = A @ h0                   (dominant matmul, tiled + accumulated)
#   h_n = GELU(concat([h0, m]) @ [[Wself]; [Wmsg]])
# grid = (row_tiles, col_tiles);  col (reduction) axis is last / "arbitrary"
# ----------------------------------------------------------------------------
def node_mpnn_kernel(a_ref, x_ref, win_ref, wsm_ref, hn_ref, acc_ref, h0_ref):
    i = pl.program_id(0)
    k = pl.program_id(1)
    nk = pl.num_programs(1)

    @pl.when(k == 0)
    def _():
        acc_ref[...] = jnp.zeros_like(acc_ref)

    # input projection for this K-block of source nodes (bf16 in, f32 acc)
    h0_k = jnp.dot(x_ref[...], win_ref[...],
                   preferred_element_type=jnp.float32).astype(jnp.bfloat16)

    # stash h0 of this row tile (row/col partitions are identical, TM == TK)
    @pl.when(k == i)
    def _():
        h0_ref[...] = h0_k

    # m_tile += A[i, k] @ h0_k   (bf16 x bf16 -> f32 accumulator)
    acc_ref[...] += jnp.dot(a_ref[...], h0_k,
                            preferred_element_type=jnp.float32)

    @pl.when(k == nk - 1)
    def _():
        # fused self/message transform: concat([h0, m]) @ [[Wself]; [Wmsg]]
        h_in = jnp.concatenate(
            [h0_ref[...], acc_ref[...].astype(jnp.bfloat16)], axis=-1)
        z = jnp.dot(h_in, wsm_ref[...], preferred_element_type=jnp.float32)
        hn_ref[...] = _gelu_exact(z).astype(hn_ref.dtype)


# ----------------------------------------------------------------------------
# kernel 2: readout + predictor
#   h_g  = A_n2g @ h_n            (streamed over node tiles, f32 accumulator)
#   pred = GELU(h_g @ W1 + b1) @ W2 + b2     (last-tile epilogue)
# ----------------------------------------------------------------------------
def readout_predictor_kernel(an2g_ref, hn_ref, w1_ref, b1_ref, w2_ref, b2_ref,
                             out_ref, hg_ref):
    k = pl.program_id(0)
    nk = pl.num_programs(0)

    @pl.when(k == 0)
    def _():
        hg_ref[...] = jnp.zeros_like(hg_ref)

    hg_ref[...] += jnp.dot(an2g_ref[...], hn_ref[...],
                           preferred_element_type=jnp.float32)

    @pl.when(k == nk - 1)
    def _():
        z1 = jnp.dot(hg_ref[...].astype(jnp.bfloat16), w1_ref[...],
                     preferred_element_type=jnp.float32) + b1_ref[...]
        a1 = _gelu_exact(z1).astype(jnp.bfloat16)
        pred = jnp.dot(a1, w2_ref[...],
                       preferred_element_type=jnp.float32) + b2_ref[...]
        out_ref[...] = pred.astype(out_ref.dtype)


# ----------------------------------------------------------------------------
# wrapper
# ----------------------------------------------------------------------------
@functools.partial(jax.jit, static_argnames=("tile_n",))
def graph_classifier_forward(A, x_n, abs_level, rel_level, A_n2g, params,
                             *, tile_n=256):
    N, F_in = x_n.shape
    B = A_n2g.shape[0]
    E = params["Win"].shape[1]
    C = params["W2"].shape[1]

    # ---------------- padded / fused shapes ---------------------------------
    F_pad = _round_up(F_in + 2, 128)           # +2: folded abs/rel levels
    E_pad = _round_up(E, 128)
    C_pad = _round_up(C, 128)
    B_pad = _round_up(B, 8)
    tile = min(tile_n, _round_up(N, 128))      # modest tiles: fits v7x 64MiB VMEM
    N_pad = _round_up(N, tile)
    n_tiles = N_pad // tile

    # fold level embeddings into the input projection
    x_aug = jnp.concatenate([x_n, abs_level, rel_level], axis=1)
    win_aug = jnp.concatenate(
        [params["Win"], params["wabs"], params["wrel"]], axis=0)

    # zero-padded bf16 matmul operands (A / A_n2g are 0/1 -> exact in bf16)
    A_p = _pad2(A, N_pad, N_pad).astype(jnp.bfloat16)
    x_p = _pad2(x_aug, N_pad, F_pad).astype(jnp.bfloat16)
    win_p = _pad2(win_aug, F_pad, E_pad).astype(jnp.bfloat16)
    wsm_p = jnp.concatenate(                   # stacked [2*E_pad, E_pad]
        [_pad2(params["Wself"], E_pad, E_pad),
         _pad2(params["Wmsg"], E_pad, E_pad)], axis=0).astype(jnp.bfloat16)
    an2g_p = _pad2(A_n2g, B_pad, N_pad).astype(jnp.bfloat16)
    w1_p = _pad2(params["W1"], E_pad, E_pad).astype(jnp.bfloat16)
    b1_p = _pad2(params["b1"], 1, E_pad).astype(jnp.float32)
    w2_p = _pad2(params["W2"], E_pad, C_pad).astype(jnp.bfloat16)
    b2_p = _pad2(params["b2"], 1, C_pad).astype(jnp.float32)

    vmem_limit = 32 * 1024 * 1024              # safe on v5e/v6e/v7x

    # ---------------- kernel 1: node pipeline --------------------------------
    cost1 = pl.CostEstimate(
        flops=int(2 * N_pad * N_pad * E_pad
                  + 2 * n_tiles * N_pad * F_pad * E_pad
                  + 2 * N_pad * (2 * E_pad) * E_pad),
        transcendentals=int(N_pad * E_pad),
        bytes_accessed=int(2 * N_pad * N_pad
                           + 2 * n_tiles * N_pad * F_pad
                           + 2 * (F_pad * E_pad + 2 * E_pad * E_pad)
                           + 2 * N_pad * E_pad),
    )
    h_n = pl.pallas_call(
        node_mpnn_kernel,
        out_shape=jax.ShapeDtypeStruct((N_pad, E_pad), jnp.bfloat16),
        grid_spec=pltpu.PrefetchScalarGridSpec(
            num_scalar_prefetch=0,
            grid=(n_tiles, n_tiles),
            in_specs=[
                pl.BlockSpec((tile, tile), lambda i, k: (i, k)),        # A
                pl.BlockSpec((tile, F_pad), lambda i, k: (k, 0)),       # x (K-block)
                pl.BlockSpec((F_pad, E_pad), lambda i, k: (0, 0)),      # Win (resident)
                pl.BlockSpec((2 * E_pad, E_pad), lambda i, k: (0, 0)),  # Wself/Wmsg
            ],
            out_specs=pl.BlockSpec((tile, E_pad), lambda i, k: (i, 0)),
            scratch_shapes=[
                pltpu.VMEM((tile, E_pad), jnp.float32),    # m accumulator
                pltpu.VMEM((tile, E_pad), jnp.bfloat16),   # stashed h0 row tile
            ],
        ),
        compiler_params=pltpu.CompilerParams(
            dimension_semantics=("parallel", "arbitrary"),
            vmem_limit_bytes=vmem_limit,
        ),
        cost_estimate=cost1,
    )(A_p, x_p, win_p, wsm_p)

    # ---------------- kernel 2: readout + predictor --------------------------
    cost2 = pl.CostEstimate(
        flops=int(2 * B_pad * N_pad * E_pad + 2 * B_pad * E_pad * E_pad
                  + 2 * B_pad * E_pad * C_pad),
        transcendentals=int(B_pad * E_pad),
        bytes_accessed=int(2 * B_pad * N_pad + 2 * N_pad * E_pad
                           + 2 * (E_pad * E_pad + E_pad * C_pad)
                           + 4 * B_pad * C_pad),
    )
    pred_pad = pl.pallas_call(
        readout_predictor_kernel,
        out_shape=jax.ShapeDtypeStruct((B_pad, C_pad), jnp.float32),
        grid_spec=pltpu.PrefetchScalarGridSpec(
            num_scalar_prefetch=0,
            grid=(n_tiles,),
            in_specs=[
                pl.BlockSpec((B_pad, tile), lambda k: (0, k)),     # A_n2g
                pl.BlockSpec((tile, E_pad), lambda k: (k, 0)),     # h_n
                pl.BlockSpec((E_pad, E_pad), lambda k: (0, 0)),    # W1
                pl.BlockSpec((1, E_pad), lambda k: (0, 0)),        # b1
                pl.BlockSpec((E_pad, C_pad), lambda k: (0, 0)),    # W2
                pl.BlockSpec((1, C_pad), lambda k: (0, 0)),        # b2
            ],
            out_specs=pl.BlockSpec((B_pad, C_pad), lambda k: (0, 0)),
            scratch_shapes=[pltpu.VMEM((B_pad, E_pad), jnp.float32)],
        ),
        compiler_params=pltpu.CompilerParams(
            dimension_semantics=("arbitrary",),
            vmem_limit_bytes=vmem_limit,
        ),
        cost_estimate=cost2,
    )(an2g_p, h_n, w1_p, b1_p, w2_p, b2_p)

    return pred_pad[:B, :C]


# ----------------------------------------------------------------------------
# parameters & pure-JAX reference (f32) for correctness checking
# ----------------------------------------------------------------------------
def init_params(key, in_feat, emb_size, num_classes):
    ks = jax.random.split(key, 9)

    def lin(k, fan_in, shape):
        bound = 1.0 / math.sqrt(fan_in)
        return jax.random.uniform(k, shape, jnp.float32, -bound, bound)

    return {
        "Win":   lin(ks[0], in_feat, (in_feat, emb_size)),
        "wabs":  lin(ks[1], 1, (1, emb_size)),
        "wrel":  lin(ks[2], 1, (1, emb_size)),
        "Wself": lin(ks[3], emb_size, (emb_size, emb_size)),
        "Wmsg":  lin(ks[4], emb_size, (emb_size, emb_size)),
        # predictor = nn.Linear(emb, emb) -> GELU -> nn.Linear(emb, num_classes)
        "W1":    lin(ks[5], emb_size, (emb_size, emb_size)),
        "b1":    lin(ks[6], emb_size, (1, emb_size)),
        "W2":    lin(ks[7], emb_size, (emb_size, num_classes)),
        "b2":    lin(ks[8], emb_size, (1, num_classes)),
    }
    # TODO(synk): the real LayerDAG graph_encoder (BiMPNNEncoder with categorical
    # embeddings / optional y-conditioning, multiple bidirectional rounds) is an
    # injected constructor argument; it is replaced by the dense single-round
    # MPNN above with y=None.


def reference_forward(A, x_n, abs_level, rel_level, A_n2g, params):
    h0 = x_n @ params["Win"] + abs_level * params["wabs"] + rel_level * params["wrel"]
    m = A @ h0
    h_n = _gelu_exact(h0 @ params["Wself"] + m @ params["Wmsg"])
    h_g = A_n2g @ h_n
    z1 = h_g @ params["W1"] + params["b1"]
    return _gelu_exact(z1) @ params["W2"] + params["b2"]


# ----------------------------------------------------------------------------
if __name__ == "__main__":
    key = jax.random.PRNGKey(0)
    k_param, k_x, k_a, k_lvl = jax.random.split(key, 4)

    # Small shapes consistent with the module's forward.
    N = 16            # total nodes across the batch of DAGs
    B = 2             # number of graphs
    F_IN = 16         # raw node feature size
    EMB = 32          # emb_size
    C = 4             # num_classes

    params = init_params(k_param, F_IN, EMB, C)

    x_n = jax.random.normal(k_x, (N, F_IN), jnp.float32)
    A = (jax.random.uniform(k_a, (N, N)) < 0.2).astype(jnp.float32)
    abs_level = jax.random.uniform(k_lvl, (N, 1), jnp.float32, 0.0, 4.0)
    rel_level = abs_level / 4.0
    A_n2g = jnp.stack(
        [
            jnp.concatenate([jnp.ones(N // 2), jnp.zeros(N - N // 2)]),
            jnp.concatenate([jnp.zeros(N // 2), jnp.ones(N - N // 2)]),
        ],
        axis=0,
    ).astype(jnp.float32)

    pred_g = graph_classifier_forward(A, x_n, abs_level, rel_level, A_n2g, params)
    jax.block_until_ready(pred_g)
    assert pred_g.shape == (B, C)

    ref = reference_forward(A, x_n, abs_level, rel_level, A_n2g, params)
    assert bool(jnp.all(jnp.isfinite(pred_g)))
    assert jnp.allclose(pred_g, ref, atol=1e-1, rtol=1e-1), (pred_g, ref)
    print("KERNEL_OK")
</pallas_src>

<mosaic_0001>
module attributes {stable_mosaic.version = 11 : i64} {
  func.func @node_mpnn_kernel(%arg0: i32, %arg1: i32, %arg2: memref<128x128xbf16, #tpu.memory_space<vmem>>, %arg3: memref<128x128xbf16, #tpu.memory_space<vmem>>, %arg4: memref<128x128xbf16, #tpu.memory_space<vmem>>, %arg5: memref<256x128xbf16, #tpu.memory_space<vmem>>, %arg6: memref<128x128xbf16, #tpu.memory_space<vmem>>, %arg7: memref<128x128xf32, #tpu.memory_space<vmem>>, %arg8: memref<128x128xbf16, #tpu.memory_space<vmem>>) attributes {dimension_semantics = [#tpu.dimension_semantics<parallel>, #tpu.dimension_semantics<arbitrary>], iteration_bounds = array<i64: 1, 1>, scalar_prefetch = 0 : i64, scratch_operands = 2 : i64, tpu.core_type = #tpu.core_type<tc>, window_params = [{transform_indices = @transform_0, window_bounds = array<i64: 128, 128>}, {transform_indices = @transform_1, window_bounds = array<i64: 128, 128>}, {pipeline_mode = #tpu.pipeline_mode<synchronous>, transform_indices = @transform_2, window_bounds = array<i64: 128, 128>}, {pipeline_mode = #tpu.pipeline_mode<synchronous>, transform_indices = @transform_3, window_bounds = array<i64: 256, 128>}, {transform_indices = @transform_4, window_bounds = array<i64: 128, 128>}]} {
    %c0_i32 = arith.constant 0 : i32
    %0 = arith.cmpi eq, %arg1, %c0_i32 : i32
    %1 = arith.extui %0 : i1 to i32
    %c0_i32_0 = arith.constant 0 : i32
    %2 = arith.cmpi ne, %1, %c0_i32_0 : i32
    scf.if %2 {
      %cst_14 = arith.constant 0.000000e+00 : f32
      %18 = vector.broadcast %cst_14 : f32 to vector<128x128xf32>
      %c0_15 = arith.constant 0 : index
      %c0_16 = arith.constant 0 : index
      %19 = vector.load %arg7[%c0_15, %c0_16] : memref<128x128xf32, #tpu.memory_space<vmem>>, vector<128x128xf32>
      tpu.vector_store %arg7[%c0_15, %c0_16], %18 {strides = array<i32>} : memref<128x128xf32, #tpu.memory_space<vmem>>, vector<128x128xf32>,
    } else {
    }
    %c0 = arith.constant 0 : index
    %c0_1 = arith.constant 0 : index
    %3 = vector.load %arg3[%c0, %c0_1] : memref<128x128xbf16, #tpu.memory_space<vmem>>, vector<128x128xbf16>
    %c0_2 = arith.constant 0 : index
    %c0_3 = arith.constant 0 : index
    %4 = vector.load %arg4[%c0_2, %c0_3] : memref<128x128xbf16, #tpu.memory_space<vmem>>, vector<128x128xbf16>
    %cst = arith.constant dense<0.000000e+00> : vector<128x128xf32>
    %5 = tpu.matmul %3, %4, %cst {dimension_numbers = #tpu.dot_dimension_numbers<[1], [0], [0], [1], [0, 0, 1, 1], [], []>} : vector<128x128xbf16>, vector<128x128xbf16>, vector<128x128xf32> -> vector<128x128xf32>
    %6 = arith.truncf %5 : vector<128x128xf32> to vector<128x128xbf16>
    %7 = arith.cmpi eq, %arg1, %arg0 : i32
    %8 = arith.extui %7 : i1 to i32
    %c0_i32_4 = arith.constant 0 : i32
    %9 = arith.cmpi ne, %8, %c0_i32_4 : i32
    scf.if %9 {
      %c0_14 = arith.constant 0 : index
      %c0_15 = arith.constant 0 : index
      %18 = vector.load %arg8[%c0_14, %c0_15] : memref<128x128xbf16, #tpu.memory_space<vmem>>, vector<128x128xbf16>
      tpu.vector_store %arg8[%c0_14, %c0_15], %6 {strides = array<i32>} : memref<128x128xbf16, #tpu.memory_space<vmem>>, vector<128x128xbf16>,
    } else {
    }
    %c0_5 = arith.constant 0 : index
    %c0_6 = arith.constant 0 : index
    %10 = vector.load %arg7[%c0_5, %c0_6] : memref<128x128xf32, #tpu.memory_space<vmem>>, vector<128x128xf32>
    %c0_7 = arith.constant 0 : index
    %c0_8 = arith.constant 0 : index
    %11 = vector.load %arg2[%c0_7, %c0_8] : memref<128x128xbf16, #tpu.memory_space<vmem>>, vector<128x128xbf16>
    %cst_9 = arith.constant dense<0.000000e+00> : vector<128x128xf32>
    %12 = tpu.matmul %11, %6, %cst_9 {dimension_numbers = #tpu.dot_dimension_numbers<[1], [0], [0], [1], [0, 0, 1, 1], [], []>} : vector<128x128xbf16>, vector<128x128xbf16>, vector<128x128xf32> -> vector<128x128xf32>
    %13 = arith.addf %10, %12 : vector<128x128xf32>
    %c0_10 = arith.constant 0 : index
    %c0_11 = arith.constant 0 : index
    %14 = vector.load %arg7[%c0_10, %c0_11] : memref<128x128xf32, #tpu.memory_space<vmem>>, vector<128x128xf32>
    tpu.vector_store %arg7[%c0_10, %c0_11], %13 {strides = array<i32>} : memref<128x128xf32, #tpu.memory_space<vmem>>, vector<128x128xf32>,
    %c0_i32_12 = arith.constant 0 : i32
    %15 = arith.cmpi eq, %arg1, %c0_i32_12 : i32
    %16 = arith.extui %15 : i1 to i32
    %c0_i32_13 = arith.constant 0 : i32
    %17 = arith.cmpi ne, %16, %c0_i32_13 : i32
    scf.if %17 {
      %c0_14 = arith.constant 0 : index
      %c0_15 = arith.constant 0 : index
      %18 = vector.load %arg8[%c0_14, %c0_15] : memref<128x128xbf16, #tpu.memory_space<vmem>>, vector<128x128xbf16>
      %c0_16 = arith.constant 0 : index
      %c0_17 = arith.constant 0 : index
      %19 = vector.load %arg7[%c0_16, %c0_17] : memref<128x128xf32, #tpu.memory_space<vmem>>, vector<128x128xf32>
      %20 = arith.truncf %19 : vector<128x128xf32> to vector<128x128xbf16>
      %21 = tpu.concatenate %18, %20 in 1 : vector<128x128xbf16>, vector<128x128xbf16> -> vector<128x256xbf16>
      %c0_18 = arith.constant 0 : index
      %c0_19 = arith.constant 0 : index
      %22 = vector.load %arg5[%c0_18, %c0_19] : memref<256x128xbf16, #tpu.memory_space<vmem>>, vector<256x128xbf16>
      %cst_20 = arith.constant dense<0.000000e+00> : vector<128x128xf32>
      %23 = tpu.matmul %21, %22, %cst_20 {dimension_numbers = #tpu.dot_dimension_numbers<[1], [0], [0], [1], [0, 0, 1, 1], [], []>} : vector<128x256xbf16>, vector<256x128xbf16>, vector<128x128xf32> -> vector<128x128xf32>
      %cst_21 = arith.constant 5.000000e-01 : f32
      %24 = vector.broadcast %cst_21 : f32 to vector<128x128xf32>
      %25 = arith.mulf %24, %23 : vector<128x128xf32>
      %cst_22 = arith.constant 0.707106769 : f32
      %26 = vector.broadcast %cst_22 : f32 to vector<128x128xf32>
      %27 = arith.mulf %23, %26 : vector<128x128xf32>
      %28 = math.erf %27 : vector<128x128xf32>
      %cst_23 = arith.constant 1.000000e+00 : f32
      %29 = vector.broadcast %cst_23 : f32 to vector<128x128xf32>
      %30 = arith.addf %29, %28 : vector<128x128xf32>
      %31 = arith.mulf %25, %30 : vector<128x128xf32>
      %32 = arith.truncf %31 : vector<128x128xf32> to vector<128x128xbf16>
      %c0_24 = arith.constant 0 : index
      %c0_25 = arith.constant 0 : index
      %33 = vector.load %arg6[%c0_24, %c0_25] : memref<128x128xbf16, #tpu.memory_space<vmem>>, vector<128x128xbf16>
      tpu.vector_store %arg6[%c0_24, %c0_25], %32 {strides = array<i32>} : memref<128x128xbf16, #tpu.memory_space<vmem>>, vector<128x128xbf16>,
    } else {
    }
    return
  }
  func.func @transform_0(%arg0: i32, %arg1: i32) -> (i32, i32) {
    %c0_i32 = arith.constant 0 : i32
    return %arg0, %arg1 : i32, i32
  }
  func.func @transform_1(%arg0: i32, %arg1: i32) -> (i32, i32) {
    %c0_i32 = arith.constant 0 : i32
    %c0_i32_0 = arith.constant 0 : i32
    return %arg1, %c0_i32 : i32, i32
  }
  func.func @transform_2(%arg0: i32, %arg1: i32) -> (i32, i32) {
    %c0_i32 = arith.constant 0 : i32
    %c0_i32_0 = arith.constant 0 : i32
    %c0_i32_1 = arith.constant 0 : i32
    return %c0_i32, %c0_i32_0 : i32, i32
  }
  func.func @transform_3(%arg0: i32, %arg1: i32) -> (i32, i32) {
    %c0_i32 = arith.constant 0 : i32
    %c0_i32_0 = arith.constant 0 : i32
    %c0_i32_1 = arith.constant 0 : i32
    return %c0_i32, %c0_i32_0 : i32, i32
  }
  func.func @transform_4(%arg0: i32, %arg1: i32) -> (i32, i32) {
    %c0_i32 = arith.constant 0 : i32
    %c0_i32_0 = arith.constant 0 : i32
    return %arg0, %c0_i32 : i32, i32
  }
}

module attributes {stable_mosaic.version = 11 : i64} {
  func.func @readout_predictor_kernel(%arg0: i32, %arg1: memref<8x128xbf16, #tpu.memory_space<vmem>>, %arg2: memref<128x128xbf16, #tpu.memory_space<vmem>>, %arg3: memref<128x128xbf16, #tpu.memory_space<vmem>>, %arg4: memref<1x128xf32, #tpu.memory_space<vmem>>, %arg5: memref<128x128xbf16, #tpu.memory_space<vmem>>, %arg6: memref<1x128xf32, #tpu.memory_space<vmem>>, %arg7: memref<8x128xf32, #tpu.memory_space<vmem>>, %arg8: memref<8x128xf32, #tpu.memory_space<vmem>>) attributes {dimension_semantics = [#tpu.dimension_semantics<arbitrary>], iteration_bounds = array<i64: 1>, scalar_prefetch = 0 : i64, scratch_operands = 1 : i64, tpu.core_type = #tpu.core_type<tc>, window_params = [{transform_indices = @transform_0, window_bounds = array<i64: 8, 128>}, {transform_indices = @transform_1, window_bounds = array<i64: 128, 128>}, {pipeline_mode = #tpu.pipeline_mode<synchronous>, transform_indices = @transform_2, window_bounds = array<i64: 128, 128>}, {pipeline_mode = #tpu.pipeline_mode<synchronous>, transform_indices = @transform_3, window_bounds = array<i64: 1, 128>}, {pipeline_mode = #tpu.pipeline_mode<synchronous>, transform_indices = @transform_4, window_bounds = array<i64: 128, 128>}, {pipeline_mode = #tpu.pipeline_mode<synchronous>, transform_indices = @transform_5, window_bounds = array<i64: 1, 128>}, {pipeline_mode = #tpu.pipeline_mode<synchronous>, transform_indices = @transform_6, window_bounds = array<i64: 8, 128>}]} {
    %c0_i32 = arith.constant 0 : i32
    %0 = arith.cmpi eq, %arg0, %c0_i32 : i32
    %1 = arith.extui %0 : i1 to i32
    %c0_i32_0 = arith.constant 0 : i32
    %2 = arith.cmpi ne, %1, %c0_i32_0 : i32
    scf.if %2 {
      %cst_10 = arith.constant 0.000000e+00 : f32
      %12 = vector.broadcast %cst_10 : f32 to vector<8x128xf32>
      %c0_11 = arith.constant 0 : index
      %c0_12 = arith.constant 0 : index
      %13 = vector.load %arg8[%c0_11, %c0_12] : memref<8x128xf32, #tpu.memory_space<vmem>>, vector<8x128xf32>
      tpu.vector_store %arg8[%c0_11, %c0_12], %12 {strides = array<i32>} : memref<8x128xf32, #tpu.memory_space<vmem>>, vector<8x128xf32>,
    } else {
    }
    %c0 = arith.constant 0 : index
    %c0_1 = arith.constant 0 : index
    %3 = vector.load %arg8[%c0, %c0_1] : memref<8x128xf32, #tpu.memory_space<vmem>>, vector<8x128xf32>
    %c0_2 = arith.constant 0 : index
    %c0_3 = arith.constant 0 : index
    %4 = vector.load %arg1[%c0_2, %c0_3] : memref<8x128xbf16, #tpu.memory_space<vmem>>, vector<8x128xbf16>
    %c0_4 = arith.constant 0 : index
    %c0_5 = arith.constant 0 : index
    %5 = vector.load %arg2[%c0_4, %c0_5] : memref<128x128xbf16, #tpu.memory_space<vmem>>, vector<128x128xbf16>
    %cst = arith.constant dense<0.000000e+00> : vector<8x128xf32>
    %6 = tpu.matmul %4, %5, %cst {dimension_numbers = #tpu.dot_dimension_numbers<[1], [0], [0], [1], [0, 0, 1, 1], [], []>} : vector<8x128xbf16>, vector<128x128xbf16>, vector<8x128xf32> -> vector<8x128xf32>
    %7 = arith.addf %3, %6 : vector<8x128xf32>
    %c0_6 = arith.constant 0 : index
    %c0_7 = arith.constant 0 : index
    %8 = vector.load %arg8[%c0_6, %c0_7] : memref<8x128xf32, #tpu.memory_space<vmem>>, vector<8x128xf32>
    tpu.vector_store %arg8[%c0_6, %c0_7], %7 {strides = array<i32>} : memref<8x128xf32, #tpu.memory_space<vmem>>, vector<8x128xf32>,
    %c0_i32_8 = arith.constant 0 : i32
    %9 = arith.cmpi eq, %arg0, %c0_i32_8 : i32
    %10 = arith.extui %9 : i1 to i32
    %c0_i32_9 = arith.constant 0 : i32
    %11 = arith.cmpi ne, %10, %c0_i32_9 : i32
    scf.if %11 {
      %c0_10 = arith.constant 0 : index
      %c0_11 = arith.constant 0 : index
      %12 = vector.load %arg8[%c0_10, %c0_11] : memref<8x128xf32, #tpu.memory_space<vmem>>, vector<8x128xf32>
      %13 = arith.truncf %12 : vector<8x128xf32> to vector<8x128xbf16>
      %c0_12 = arith.constant 0 : index
      %c0_13 = arith.constant 0 : index
      %14 = vector.load %arg3[%c0_12, %c0_13] : memref<128x128xbf16, #tpu.memory_space<vmem>>, vector<128x128xbf16>
      %cst_14 = arith.constant dense<0.000000e+00> : vector<8x128xf32>
      %15 = tpu.matmul %13, %14, %cst_14 {dimension_numbers = #tpu.dot_dimension_numbers<[1], [0], [0], [1], [0, 0, 1, 1], [], []>} : vector<8x128xbf16>, vector<128x128xbf16>, vector<8x128xf32> -> vector<8x128xf32>
      %c0_15 = arith.constant 0 : index
      %c0_16 = arith.constant 0 : index
      %16 = vector.load %arg4[%c0_15, %c0_16] : memref<1x128xf32, #tpu.memory_space<vmem>>, vector<1x128xf32>
      %17 = vector.broadcast %16 : vector<1x128xf32> to vector<8x128xf32>
      %18 = arith.addf %15, %17 : vector<8x128xf32>
      %cst_17 = arith.constant 5.000000e-01 : f32
      %19 = vector.broadcast %cst_17 : f32 to vector<8x128xf32>
      %20 = arith.mulf %19, %18 : vector<8x128xf32>
      %cst_18 = arith.constant 0.707106769 : f32
      %21 = vector.broadcast %cst_18 : f32 to vector<8x128xf32>
      %22 = arith.mulf %18, %21 : vector<8x128xf32>
      %23 = math.erf %22 : vector<8x128xf32>
      %cst_19 = arith.constant 1.000000e+00 : f32
      %24 = vector.broadcast %cst_19 : f32 to vector<8x128xf32>
      %25 = arith.addf %24, %23 : vector<8x128xf32>
      %26 = arith.mulf %20, %25 : vector<8x128xf32>
      %27 = arith.truncf %26 : vector<8x128xf32> to vector<8x128xbf16>
      %c0_20 = arith.constant 0 : index
      %c0_21 = arith.constant 0 : index
      %28 = vector.load %arg5[%c0_20, %c0_21] : memref<128x128xbf16, #tpu.memory_space<vmem>>, vector<128x128xbf16>
      %cst_22 = arith.constant dense<0.000000e+00> : vector<8x128xf32>
      %29 = tpu.matmul %27, %28, %cst_22 {dimension_numbers = #tpu.dot_dimension_numbers<[1], [0], [0], [1], [0, 0, 1, 1], [], []>} : vector<8x128xbf16>, vector<128x128xbf16>, vector<8x128xf32> -> vector<8x128xf32>
      %c0_23 = arith.constant 0 : index
      %c0_24 = arith.constant 0 : index
      %30 = vector.load %arg6[%c0_23, %c0_24] : memref<1x128xf32, #tpu.memory_space<vmem>>, vector<1x128xf32>
      %31 = vector.broadcast %30 : vector<1x128xf32> to vector<8x128xf32>
      %32 = arith.addf %29, %31 : vector<8x128xf32>
      %c0_25 = arith.constant 0 : index
      %c0_26 = arith.constant 0 : index
      %33 = vector.load %arg7[%c0_25, %c0_26] : memref<8x128xf32, #tpu.memory_space<vmem>>, vector<8x128xf32>
      tpu.vector_store %arg7[%c0_25, %c0_26], %32 {strides = array<i32>} : memref<8x128xf32, #tpu.memory_space<vmem>>, vector<8x128xf32>,
    } else {
    }
    return
  }
  func.func @transform_0(%arg0: i32) -> (i32, i32) {
    %c0_i32 = arith.constant 0 : i32
    %c0_i32_0 = arith.constant 0 : i32
    return %c0_i32, %arg0 : i32, i32
  }
  func.func @transform_1(%arg0: i32) -> (i32, i32) {
    %c0_i32 = arith.constant 0 : i32
    %c0_i32_0 = arith.constant 0 : i32
    return %arg0, %c0_i32 : i32, i32
  }
  func.func @transform_2(%arg0: i32) -> (i32, i32) {
    %c0_i32 = arith.constant 0 : i32
    %c0_i32_0 = arith.constant 0 : i32
    %c0_i32_1 = arith.constant 0 : i32
    return %c0_i32, %c0_i32_0 : i32, i32
  }
  func.func @transform_3(%arg0: i32) -> (i32, i32) {
    %c0_i32 = arith.constant 0 : i32
    %c0_i32_0 = arith.constant 0 : i32
    %c0_i32_1 = arith.constant 0 : i32
    return %c0_i32, %c0_i32_0 : i32, i32
  }
  func.func @transform_4(%arg0: i32) -> (i32, i32) {
    %c0_i32 = arith.constant 0 : i32
    %c0_i32_0 = arith.constant 0 : i32
    %c0_i32_1 = arith.constant 0 : i32
    return %c0_i32, %c0_i32_0 : i32, i32
  }
  func.func @transform_5(%arg0: i32) -> (i32, i32) {
    %c0_i32 = arith.constant 0 : i32
    %c0_i32_0 = arith.constant 0 : i32
    %c0_i32_1 = arith.constant 0 : i32
    return %c0_i32, %c0_i32_0 : i32, i32
  }
  func.func @transform_6(%arg0: i32) -> (i32, i32) {
    %c0_i32 = arith.constant 0 : i32
    %c0_i32_0 = arith.constant 0 : i32
    %c0_i32_1 = arith.constant 0 : i32
    return %c0_i32, %c0_i32_0 : i32, i32
  }
}

</mosaic_0001>

<llo_original>
// kernel: graph_classifier_forward.3
$region0: #{graph_classifier_forward.3}
  #allocation0 [shape = 'u32[]', space=smem, size = 0x4, offset = 0x4, fixed_abs, tag = 'smem constant byte address 0x4 - core index']
  #allocation1 [shape = 'u32[144,128]{1,0:T(1,128)}', space=vmem, size = 0x12000, scoped, tag = 'internal scratch']
  #allocation2 [shape = 'f32[8,128]{1,0:T(8,128)}', space=vmem, size = 0x1000, scoped, tag = 'scratch operand']
  %s0 = inlined_call_operand.vmem [shape: bf16[8,128], index: 0, kind: input, shape index: {}]
  %s1 = inlined_call_operand.vmem [shape: bf16[128,128], index: 1, kind: input, shape index: {}]
  %s2 = inlined_call_operand.vmem [shape: bf16[128,128], index: 2, kind: input, shape index: {}]
  %s3 = inlined_call_operand.vmem [shape: f32[1,128], index: 3, kind: input, shape index: {}]
  %s4 = inlined_call_operand.vmem [shape: bf16[128,128], index: 4, kind: input, shape index: {}]
  %s5 = inlined_call_operand.vmem [shape: f32[1,128], index: 5, kind: input, shape index: {}]
  %s6 = inlined_call_operand.vmem [shape: f32[8,128], index: 6, kind: output, shape index: {}]
  %s7 = sld [smem:[#allocation0]]
  $region42: #{graph_classifier_forward.3} parent=0
    _
  %s9 = ssub.s32 1, %s7
  %s10 = scalar_select 0, %s9, %s7
  // Predicated region
  $region2: #{graph_classifier_forward.3} parent=0 // pred_check
    _
  $region3: #{graph_classifier_forward.3} parent=0 // pred_check_branch
    %12 = sbr.rel (0) target = $region5
  $region4: #{graph_classifier_forward.3} parent=0 // pred_region
    _
  $region5: #{graph_classifier_forward.3} parent=0 // pred_fallthru
    _
  // Predicated region
  $region6: #{graph_classifier_forward.3} parent=0 // pred_check
    _
  $region7: #{graph_classifier_forward.3} parent=0 // pred_check_branch
    %14 = sbr.rel (0) target = $region9
  $region8: #{graph_classifier_forward.3} parent=0 // pred_region
    _
  $region9: #{graph_classifier_forward.3} parent=0 // pred_fallthru
    _
  // Predicated region
  $region10: #{graph_classifier_forward.3} parent=0 // pred_check
    _
  $region11: #{graph_classifier_forward.3} parent=0 // pred_check_branch
    %16 = sbr.rel (0) target = $region13
  $region12: #{graph_classifier_forward.3} parent=0 // pred_region
    _
  $region13: #{graph_classifier_forward.3} parent=0 // pred_fallthru
    _
  // Predicated region
  $region14: #{graph_classifier_forward.3} parent=0 // pred_check
    _
  $region15: #{graph_classifier_forward.3} parent=0 // pred_check_branch
    %18 = sbr.rel (0) target = $region17
  $region16: #{graph_classifier_forward.3} parent=0 // pred_region
    _
  $region17: #{graph_classifier_forward.3} parent=0 // pred_fallthru
    _
  // Predicated region
  $region18: #{graph_classifier_forward.3} parent=0 // pred_check
    _
  $region19: #{graph_classifier_forward.3} parent=0 // pred_check_branch
    %20 = sbr.rel (0) target = $region21
  $region20: #{graph_classifier_forward.3} parent=0 // pred_region
    _
  $region21: #{graph_classifier_forward.3} parent=0 // pred_fallthru
    _
  // Predicated region
  $region22: #{graph_classifier_forward.3} parent=0 // pred_check
    _
  $region23: #{graph_classifier_forward.3} parent=0 // pred_check_branch
    %22 = sbr.rel (0) target = $region25
  $region24: #{graph_classifier_forward.3} parent=0 // pred_region
    _
  $region25: #{graph_classifier_forward.3} parent=0 // pred_fallthru
    _
  %p24 = scmp.eq.s32.totalorder 0, 0
  // Predicated region
  $region26: #{graph_classifier_forward.3} parent=0 // pred_check
    %p25 = pneg %p24
  $region27: #{graph_classifier_forward.3} parent=0 // pred_check_branch
    %27 = sbr.rel (%p25) target = $region29
  $region28: #{graph_classifier_forward.3} parent=0 // pred_region
    %28 = vst [vmem:[#allocation2] sm:$0xff] 0.0
  $region29: #{graph_classifier_forward.3} parent=0 // pred_fallthru
    _
  %v29 = vld [vmem:[#allocation2] sm:$0xff]
  %v30 = vld [vmem:[%s0] sm:$0xf]
  %v31 = vld [vmem:[%s1] sm:$0xf]
  %v32 = vld [vmem:[%s1 + $0x4] sm:$0xf]
  %v33 = vld [vmem:[%s1 + $0x8] sm:$0xf]
  %v34 = vld [vmem:[%s1 + $0xc] sm:$0xf]
  %v35 = vld [vmem:[%s1 + $0x10] sm:$0xf]
  %v36 = vld [vmem:[%s1 + $0x14] sm:$0xf]
  %v37 = vld [vmem:[%s1 + $0x18] sm:$0xf]
  %v38 = vld [vmem:[%s1 + $0x1c] sm:$0xf]
  %v39 = vld [vmem:[%s1 + $0x20] sm:$0xf]
  %v40 = vld [vmem:[%s1 + $0x24] sm:$0xf]
  %v41 = vld [vmem:[%s1 + $0x28] sm:$0xf]
  %v42 = vld [vmem:[%s1 + $0x2c] sm:$0xf]
  %v43 = vld [vmem:[%s1 + $0x30] sm:$0xf]
  %v44 = vld [vmem:[%s1 + $0x34] sm:$0xf]
  %v45 = vld [vmem:[%s1 + $0x38] sm:$0xf]
  %v46 = vld [vmem:[%s1 + $0x3c] sm:$0xf]
  %v63 = vunpack.c.l.b16 %v31
  %v64 = vunpack.c.l.b16 %v32
  %v65 = vunpack.c.l.b16 %v33
  %v66 = vunpack.c.l.b16 %v34
  %v67 = vunpack.c.l.b16 %v35
  %v68 = vunpack.c.l.b16 %v36
  %v69 = vunpack.c.l.b16 %v37
  %v70 = vunpack.c.l.b16 %v38
  %v71 = vunpack.c.l.b16 %v39
  %v72 = vunpack.c.l.b16 %v40
  %v73 = vunpack.c.l.b16 %v41
  %v74 = vunpack.c.l.b16 %v42
  %v75 = vunpack.c.l.b16 %v43
  %v76 = vunpack.c.l.b16 %v44
  %v77 = vunpack.c.l.b16 %v45
  %v78 = vunpack.c.l.b16 %v46
  %v79 = vpack.c.b16 %v64, %v63
  %v80 = vpack.c.b16 %v66, %v65
  %v81 = vpack.c.b16 %v68, %v67
  %v82 = vpack.c.b16 %v70, %v69
  %v83 = vpack.c.b16 %v72, %v71
  %v84 = vpack.c.b16 %v74, %v73
  %v85 = vpack.c.b16 %v76, %v75
  %v86 = vpack.c.b16 %v78, %v77
  %95 = vmatprep.subr.bf16.mxu0 0
  %96 = vmatpush1.bf16.msra.mxu0 %v79
  %97 = vmatprep.subr.bf16.mxu0 0
  %98 = vmatpush1.bf16.msra.mxu0 %v80
  %99 = vmatprep.subr.bf16.mxu0 0
  %100 = vmatpush1.bf16.msra.mxu0 %v81
  %101 = vmatprep.subr.bf16.mxu0 0
  %102 = vmatpush1.bf16.msra.mxu0 %v82
  %103 = vmatprep.subr.bf16.mxu0 0
  %104 = vmatpush1.bf16.msra.mxu0 %v83
  %105 = vmatprep.subr.bf16.mxu0 0
  %106 = vmatpush1.bf16.msra.mxu0 %v84
  %107 = vmatprep.subr.bf16.mxu0 0
  %108 = vmatpush1.bf16.msra.mxu0 %v85
  %109 = vmatprep.subr.bf16.mxu0 0
  %110 = vmatpush1.bf16.msra.mxu0 %v86
  %111 = vmatprep.subr.bf16.mxu0 0
  %112 = vmatpush1.bf16.msra.mxu0 0
  %113 = vmatprep.subr.bf16.mxu0 0
  %114 = vmatpush1.bf16.msra.mxu0 0
  %115 = vmatprep.subr.bf16.mxu0 0
  %116 = vmatpush1.bf16.msra.mxu0 0
  %117 = vmatprep.subr.bf16.mxu0 0
  %118 = vmatpush1.bf16.msra.mxu0 0
  %119 = vmatprep.subr.bf16.mxu0 0
  %120 = vmatpush1.bf16.msra.mxu0 0
  %121 = vmatprep.subr.bf16.mxu0 0
  %122 = vmatpush1.bf16.msra.mxu0 0
  %123 = vmatprep.subr.bf16.mxu0 0
  %124 = vmatpush1.bf16.msra.mxu0 0
  %125 = vmatprep.subr.bf16.mxu0 0
  %126 = vmatpush1.bf16.msra.mxu0 0
  %127 = vmatprep.mubr.bf16.mxu0 0
  %128 = vmatmul.mubr.bf16.gmra.mrb[0].mxu0 %v30
  %v129 = vpop.f32.mrb[0].mxu0
  %v130 = vadd.f32 0.0, %v129
  %v131 = vpop.f32.mrb[0].mxu0
  %v132 = vpop.f32.mrb[0].mxu0
  %v133 = vpop.f32.mrb[0].mxu0
  %134 = vdwg.mxu0
  %v135 = vadd.f32 %v29, %v130
  %136 = vst [vmem:[#allocation2] sm:$0xff] %v135
  // Predicated region
  $region30: #{graph_classifier_forward.3} parent=0 // pred_check
    %p137 = pneg %p24
  $region31: #{graph_classifier_forward.3} parent=0 // pred_check_branch
    %139 = sbr.rel (%p137) target = $region33
  $region32: #{graph_classifier_forward.3} parent=0 // pred_region
    %v140 = vld [vmem:[#allocation2] sm:$0xff]
    %v141 = vpack.c.bf16 %v140, %v140
    %v142 = vld [vmem:[%s2] sm:$0xf]
    %v143 = vld [vmem:[%s2 + $0x4] sm:$0xf]
    %v144 = vld [vmem:[%s2 + $0x8] sm:$0xf]
    %v145 = vld [vmem:[%s2 + $0xc] sm:$0xf]
    %v146 = vld [vmem:[%s2 + $0x10] sm:$0xf]
    %v147 = vld [vmem:[%s2 + $0x14] sm:$0xf]
    %v148 = vld [vmem:[%s2 + $0x18] sm:$0xf]
    %v149 = vld [vmem:[%s2 + $0x1c] sm:$0xf]
    %v150 = vld [vmem:[%s2 + $0x20] sm:$0xf]
    %v151 = vld [vmem:[%s2 + $0x24] sm:$0xf]
    %v152 = vld [vmem:[%s2 + $0x28] sm:$0xf]
    %v153 = vld [vmem:[%s2 + $0x2c] sm:$0xf]
    %v154 = vld [vmem:[%s2 + $0x30] sm:$0xf]
    %v155 = vld [vmem:[%s2 + $0x34] sm:$0xf]
    %v156 = vld [vmem:[%s2 + $0x38] sm:$0xf]
    %v157 = vld [vmem:[%s2 + $0x3c] sm:$0xf]
    %v158 = vld [vmem:[%s3] sm:$0x1]
    %v160 = vlaneseq
    %v161 = vshrl.u32 %v160, 7
    %v162 = vsub.s32 0, %v161
    %v163 = vrot.slane %v158, %v162
    %v181 = vunpack.c.l.b16 %v142
    %v182 = vunpack.c.l.b16 %v143
    %v183 = vunpack.c.l.b16 %v144
    %v184 = vunpack.c.l.b16 %v145
    %v185 = vunpack.c.l.b16 %v146
    %v186 = vunpack.c.l.b16 %v147
    %v187 = vunpack.c.l.b16 %v148
    %v188 = vunpack.c.l.b16 %v149
    %v189 = vunpack.c.l.b16 %v150
    %v190 = vunpack.c.l.b16 %v151
    %v191 = vunpack.c.l.b16 %v152
    %v192 = vunpack.c.l.b16 %v153
    %v193 = vunpack.c.l.b16 %v154
    %v194 = vunpack.c.l.b16 %v155
    %v195 = vunpack.c.l.b16 %v156
    %v196 = vunpack.c.l.b16 %v157
    %v197 = vpack.c.b16 %v182, %v181
    %v198 = vpack.c.b16 %v184, %v183
    %v199 = vpack.c.b16 %v186, %v185
    %v200 = vpack.c.b16 %v188, %v187
    %v201 = vpack.c.b16 %v190, %v189
    %v202 = vpack.c.b16 %v192, %v191
    %v203 = vpack.c.b16 %v194, %v193
    %v204 = vpack.c.b16 %v196, %v195
    %213 = vmatprep.subr.bf16.mxu0 0
    %214 = vmatpush1.bf16.msra.mxu0 %v197
    %215 = vmatprep.subr.bf16.mxu0 0
    %216 = vmatpush1.bf16.msra.mxu0 %v198
    %217 = vmatprep.subr.bf16.mxu0 0
    %218 = vmatpush1.bf16.msra.mxu0 %v199
    %219 = vmatprep.subr.bf16.mxu0 0
    %220 = vmatpush1.bf16.msra.mxu0 %v200
    %221 = vmatprep.subr.bf16.mxu0 0
    %222 = vmatpush1.bf16.msra.mxu0 %v201
    %223 = vmatprep.subr.bf16.mxu0 0
    %224 = vmatpush1.bf16.msra.mxu0 %v202
    %225 = vmatprep.subr.bf16.mxu0 0
    %226 = vmatpush1.bf16.msra.mxu0 %v203
    %227 = vmatprep.subr.bf16.mxu0 0
    %228 = vmatpush1.bf16.msra.mxu0 %v204
    %229 = vmatprep.subr.bf16.mxu0 0
    %230 = vmatpush1.bf16.msra.mxu0 0
    %231 = vmatprep.subr.bf16.mxu0 0
    %232 = vmatpush1.bf16.msra.mxu0 0
    %233 = vmatprep.subr.bf16.mxu0 0
    %234 = vmatpush1.bf16.msra.mxu0 0
    %235 = vmatprep.subr.bf16.mxu0 0
    %236 = vmatpush1.bf16.msra.mxu0 0
    %237 = vmatprep.subr.bf16.mxu0 0
    %238 = vmatpush1.bf16.msra.mxu0 0
    %239 = vmatprep.subr.bf16.mxu0 0
    %240 = vmatpush1.bf16.msra.mxu0 0
    %241 = vmatprep.subr.bf16.mxu0 0
    %242 = vmatpush1.bf16.msra.mxu0 0
    %243 = vmatprep.subr.bf16.mxu0 0
    %244 = vmatpush1.bf16.msra.mxu0 0
    %245 = vmatprep.mubr.bf16.mxu0 0
    %246 = vmatmul.mubr.bf16.gmra.mrb[0].mxu0 %v141
    %v247 = vpop.f32.mrb[0].mxu0
    %v248 = vadd.f32 %v163, %v247
    %v249 = vpop.f32.mrb[0].mxu0
    %v250 = vpop.f32.mrb[0].mxu0
    %v251 = vpop.f32.mrb[0].mxu0
    %252 = vdwg.mxu0
    %v253 = vmul.f32 %v248, 0.5
    %v254 = vmul.f32 %v248, 0.70710677
    %v255 = verf.f32.pop %v254
    %v256 = vadd.f32 %v255, 1.0
    %v257 = vmul.f32 %v253, %v256
    %v258 = vpack.c.bf16 %v257, %v257
    %v259 = vld [vmem:[%s4] sm:$0xf]
    %v260 = vld [vmem:[%s4 + $0x4] sm:$0xf]
    %v261 = vld [vmem:[%s4 + $0x8] sm:$0xf]
    %v262 = vld [vmem:[%s4 + $0xc] sm:$0xf]
    %v263 = vld [vmem:[%s4 + $0x10] sm:$0xf]
    %v264 = vld [vmem:[%s4 + $0x14] sm:$0xf]
    %v265 = vld [vmem:[%s4 + $0x18] sm:$0xf]
    %v266 = vld [vmem:[%s4 + $0x1c] sm:$0xf]
    %v267 = vld [vmem:[%s4 + $0x20] sm:$0xf]
    %v268 = vld [vmem:[%s4 + $0x24] sm:$0xf]
    %v269 = vld [vmem:[%s4 + $0x28] sm:$0xf]
    %v270 = vld [vmem:[%s4 + $0x2c] sm:$0xf]
    %v271 = vld [vmem:[%s4 + $0x30] sm:$0xf]
    %v272 = vld [vmem:[%s4 + $0x34] sm:$0xf]
    %v273 = vld [vmem:[%s4 + $0x38] sm:$0xf]
    %v274 = vld [vmem:[%s4 + $0x3c] sm:$0xf]
    %v275 = vld [vmem:[%s5] sm:$0x1]
    %v277 = vlaneseq
    %v278 = vshrl.u32 %v277, 7
    %v279 = vsub.s32 0, %v278
    %v280 = vrot.slane %v275, %v279
    %v298 = vunpack.c.l.b16 %v259
    %v299 = vunpack.c.l.b16 %v260
    %v300 = vunpack.c.l.b16 %v261
    %v301 = vunpack.c.l.b16 %v262
    %v302 = vunpack.c.l.b16 %v263
    %v303 = vunpack.c.l.b16 %v264
    %v304 = vunpack.c.l.b16 %v265
    %v305 = vunpack.c.l.b16 %v266
    %v306 = vunpack.c.l.b16 %v267
    %v307 = vunpack.c.l.b16 %v268
    %v308 = vunpack.c.l.b16 %v269
    %v309 = vunpack.c.l.b16 %v270
    %v310 = vunpack.c.l.b16 %v271
    %v311 = vunpack.c.l.b16 %v272
    %v312 = vunpack.c.l.b16 %v273
    %v313 = vunpack.c.l.b16 %v274
    %v314 = vpack.c.b16 %v299, %v298
    %v315 = vpack.c.b16 %v301, %v300
    %v316 = vpack.c.b16 %v303, %v302
    %v317 = vpack.c.b16 %v305, %v304
    %v318 = vpack.c.b16 %v307, %v306
    %v319 = vpack.c.b16 %v309, %v308
    %v320 = vpack.c.b16 %v311, %v310
    %v321 = vpack.c.b16 %v313, %v312
    %330 = vmatprep.subr.bf16.mxu0 0
    %331 = vmatpush1.bf16.msra.mxu0 %v314
    %332 = vmatprep.subr.bf16.mxu0 0
    %333 = vmatpush1.bf16.msra.mxu0 %v315
    %334 = vmatprep.subr.bf16.mxu0 0
    %335 = vmatpush1.bf16.msra.mxu0 %v316
    %336 = vmatprep.subr.bf16.mxu0 0
    %337 = vmatpush1.bf16.msra.mxu0 %v317
    %338 = vmatprep.subr.bf16.mxu0 0
    %339 = vmatpush1.bf16.msra.mxu0 %v318
    %340 = vmatprep.subr.bf16.mxu0 0
    %341 = vmatpush1.bf16.msra.mxu0 %v319
    %342 = vmatprep.subr.bf16.mxu0 0
    %343 = vmatpush1.bf16.msra.mxu0 %v320
    %344 = vmatprep.subr.bf16.mxu0 0
    %345 = vmatpush1.bf16.msra.mxu0 %v321
    %346 = vmatprep.subr.bf16.mxu0 0
    %347 = vmatpush1.bf16.msra.mxu0 0
    %348 = vmatprep.subr.bf16.mxu0 0
    %349 = vmatpush1.bf16.msra.mxu0 0
    %350 = vmatprep.subr.bf16.mxu0 0
    %351 = vmatpush1.bf16.msra.mxu0 0
    %352 = vmatprep.subr.bf16.mxu0 0
    %353 = vmatpush1.bf16.msra.mxu0 0
    %354 = vmatprep.subr.bf16.mxu0 0
    %355 = vmatpush1.bf16.msra.mxu0 0
    %356 = vmatprep.subr.bf16.mxu0 0
    %357 = vmatpush1.bf16.msra.mxu0 0
    %358 = vmatprep.subr.bf16.mxu0 0
    %359 = vmatpush1.bf16.msra.mxu0 0
    %360 = vmatprep.subr.bf16.mxu0 0
    %361 = vmatpush1.bf16.msra.mxu0 0
    %362 = vmatprep.mubr.bf16.mxu0 0
    %363 = vmatmul.mubr.bf16.gmra.mrb[0].mxu0 %v258
    %v364 = vpop.f32.mrb[0].mxu0
    %v365 = vadd.f32 %v280, %v364
    %v366 = vpop.f32.mrb[0].mxu0
    %v367 = vpop.f32.mrb[0].mxu0
    %v368 = vpop.f32.mrb[0].mxu0
    %369 = vdwg.mxu0
    %370 = vst [vmem:[%s6] sm:$0xff] %v365
  $region33: #{graph_classifier_forward.3} parent=0 // pred_fallthru
    _
  // Predicated region
  $region34: #{graph_classifier_forward.3} parent=0 // pred_check
    _
  $region35: #{graph_classifier_forward.3} parent=0 // pred_check_branch
    %372 = sbr.rel (0) target = $region37
  $region36: #{graph_classifier_forward.3} parent=0 // pred_region
    _
  $region37: #{graph_classifier_forward.3} parent=0 // pred_fallthru
    _
  // Predicated region
  $region38: #{graph_classifier_forward.3} parent=0 // pred_check
    _
  $region39: #{graph_classifier_forward.3} parent=0 // pred_check_branch
    %374 = sbr.rel (0) target = $region41
  $region40: #{graph_classifier_forward.3} parent=0 // pred_region
    _
  $region41: #{graph_classifier_forward.3} parent=0 // pred_fallthru
    _

// kernel: graph_classifier_forward.2
$region0: #{graph_classifier_forward.2}
  #allocation0 [shape = 'u32[]', space=smem, size = 0x4, offset = 0x4, fixed_abs, tag = 'smem constant byte address 0x4 - core index']
  #allocation1 [shape = 'u32[144,128]{1,0:T(1,128)}', space=vmem, size = 0x12000, scoped, tag = 'internal scratch']
  #allocation2 [shape = 'f32[128,128]{1,0:T(8,128)}', space=vmem, size = 0x10000, scoped, tag = 'scratch operand']
  #allocation3 [shape = 'bf16[128,128]{1,0:T(16,128)(2,1)}', space=vmem, size = 0x8000, scoped, tag = 'scratch operand']
  %s0 = inlined_call_operand.vmem [shape: bf16[128,128], index: 0, kind: input, shape index: {}]
  %s1 = inlined_call_operand.vmem [shape: bf16[128,128], index: 1, kind: input, shape index: {}]
  %s2 = inlined_call_operand.vmem [shape: bf16[128,128], index: 2, kind: input, shape index: {}]
  %s3 = inlined_call_operand.vmem [shape: bf16[256,128], index: 3, kind: input, shape index: {}]
  %s4 = inlined_call_operand.vmem [shape: bf16[128,128], index: 4, kind: output, shape index: {}]
  %s5 = sld [smem:[#allocation0]]
  $region38: #{graph_classifier_forward.2} parent=0
    _
  %s7 = ssub.s32 1, %s5
  %s8 = scalar_select 0, %s7, %s5
  // Predicated region
  $region2: #{graph_classifier_forward.2} parent=0 // pred_check
    _
  $region3: #{graph_classifier_forward.2} parent=0 // pred_check_branch
    %10 = sbr.rel (0) target = $region5
  $region4: #{graph_classifier_forward.2} parent=0 // pred_region
    _
  $region5: #{graph_classifier_forward.2} parent=0 // pred_fallthru
    _
  // Predicated region
  $region6: #{graph_classifier_forward.2} parent=0 // pred_check
    _
  $region7: #{graph_classifier_forward.2} parent=0 // pred_check_branch
    %12 = sbr.rel (0) target = $region9
  $region8: #{graph_classifier_forward.2} parent=0 // pred_region
    _
  $region9: #{graph_classifier_forward.2} parent=0 // pred_fallthru
    _
  // Predicated region
  $region10: #{graph_classifier_forward.2} parent=0 // pred_check
    _
  $region11: #{graph_classifier_forward.2} parent=0 // pred_check_branch
    %14 = sbr.rel (0) target = $region13
  $region12: #{graph_classifier_forward.2} parent=0 // pred_region
    _
  $region13: #{graph_classifier_forward.2} parent=0 // pred_fallthru
    _
  // Predicated region
  $region14: #{graph_classifier_forward.2} parent=0 // pred_check
    _
  $region15: #{graph_classifier_forward.2} parent=0 // pred_check_branch
    %16 = sbr.rel (0) target = $region17
  $region16: #{graph_classifier_forward.2} parent=0 // pred_region
    _
  $region17: #{graph_classifier_forward.2} parent=0 // pred_fallthru
    _
  %p18 = scmp.eq.s32.totalorder 0, 0
  // Predicated region
  $region18: #{graph_classifier_forward.2} parent=0 // pred_check
    %p19 = pneg %p18
  $region19: #{graph_classifier_forward.2} parent=0 // pred_check_branch
    %21 = sbr.rel (%p19) target = $region21
  $region20: #{graph_classifier_forward.2} parent=0 // pred_region
    %22 = vst [vmem:[#allocation2] sm:$0xff] 0.0
    %23 = vst [vmem:[#allocation2 + $0x8] sm:$0xff] 0.0
    %24 = vst [vmem:[#allocation2 + $0x10] sm:$0xff] 0.0
    %25 = vst [vmem:[#allocation2 + $0x18] sm:$0xff] 0.0
    %26 = vst [vmem:[#allocation2 + $0x20] sm:$0xff] 0.0
    %27 = vst [vmem:[#allocation2 + $0x28] sm:$0xff] 0.0
    %28 = vst [vmem:[#allocation2 + $0x30] sm:$0xff] 0.0
    %29 = vst [vmem:[#allocation2 + $0x38] sm:$0xff] 0.0
    %30 = vst [vmem:[#allocation2 + $0x40] sm:$0xff] 0.0
    %31 = vst [vmem:[#allocation2 + $0x48] sm:$0xff] 0.0
    %32 = vst [vmem:[#allocation2 + $0x50] sm:$0xff] 0.0
    %33 = vst [vmem:[#allocation2 + $0x58] sm:$0xff] 0.0
    %34 = vst [vmem:[#allocation2 + $0x60] sm:$0xff] 0.0
    %35 = vst [vmem:[#allocation2 + $0x68] sm:$0xff] 0.0
    %36 = vst [vmem:[#allocation2 + $0x70] sm:$0xff] 0.0
    %37 = vst [vmem:[#allocation2 + $0x78] sm:$0xff] 0.0
  $region21: #{graph_classifier_forward.2} parent=0 // pred_fallthru
    _
  %v38 = vld [vmem:[%s1] sm:$0xf]
  %v39 = vld [vmem:[%s1 + $0x4] sm:$0xf]
  %v40 = vld [vmem:[%s1 + $0x8] sm:$0xf]
  %v41 = vld [vmem:[%s1 + $0xc] sm:$0xf]
  %v42 = vld [vmem:[%s1 + $0x10] sm:$0xf]
  %v43 = vld [vmem:[%s1 + $0x14] sm:$0xf]
  %v44 = vld [vmem:[%s1 + $0x18] sm:$0xf]
  %v45 = vld [vmem:[%s1 + $0x1c] sm:$0xf]
  %v46 = vld [vmem:[%s1 + $0x20] sm:$0xf]
  %v47 = vld [vmem:[%s1 + $0x24] sm:$0xf]
  %v48 = vld [vmem:[%s1 + $0x28] sm:$0xf]
  %v49 = vld [vmem:[%s1 + $0x2c] sm:$0xf]
  %v50 = vld [vmem:[%s1 + $0x30] sm:$0xf]
  %v51 = vld [vmem:[%s1 + $0x34] sm:$0xf]
  %v52 = vld [vmem:[%s1 + $0x38] sm:$0xf]
  %v53 = vld [vmem:[%s1 + $0x3c] sm:$0xf]
  %v54 = vld [vmem:[%s2] sm:$0xf]
  %v55 = vld [vmem:[%s2 + $0x4] sm:$0xf]
  %v56 = vld [vmem:[%s2 + $0x8] sm:$0xf]
  %v57 = vld [vmem:[%s2 + $0xc] sm:$0xf]
  %v58 = vld [vmem:[%s2 + $0x10] sm:$0xf]
  %v59 = vld [vmem:[%s2 + $0x14] sm:$0xf]
  %v60 = vld [vmem:[%s2 + $0x18] sm:$0xf]
  %v61 = vld [vmem:[%s2 + $0x1c] sm:$0xf]
  %v62 = vld [vmem:[%s2 + $0x20] sm:$0xf]
  %v63 = vld [vmem:[%s2 + $0x24] sm:$0xf]
  %v64 = vld [vmem:[%s2 + $0x28] sm:$0xf]
  %v65 = vld [vmem:[%s2 + $0x2c] sm:$0xf]
  %v66 = vld [vmem:[%s2 + $0x30] sm:$0xf]
  %v67 = vld [vmem:[%s2 + $0x34] sm:$0xf]
  %v68 = vld [vmem:[%s2 + $0x38] sm:$0xf]
  %v69 = vld [vmem:[%s2 + $0x3c] sm:$0xf]
  %v86 = vunpack.c.l.b16 %v38
  %v87 = vunpack.c.l.b16 %v39
  %v88 = vunpack.c.l.b16 %v40
  %v89 = vunpack.c.l.b16 %v41
  %v90 = vunpack.c.l.b16 %v42
  %v91 = vunpack.c.l.b16 %v43
  %v92 = vunpack.c.l.b16 %v44
  %v93 = vunpack.c.l.b16 %v45
  %v94 = vunpack.c.l.b16 %v46
  %v95 = vunpack.c.l.b16 %v47
  %v96 = vunpack.c.l.b16 %v48
  %v97 = vunpack.c.l.b16 %v49
  %v98 = vunpack.c.l.b16 %v50
  %v99 = vunpack.c.l.b16 %v51
  %v100 = vunpack.c.l.b16 %v52
  %v101 = vunpack.c.l.b16 %v53
  %v102 = vpack.c.b16 %v87, %v86
  %v103 = vpack.c.b16 %v89, %v88
  %v104 = vpack.c.b16 %v91, %v90
  %v105 = vpack.c.b16 %v93, %v92
  %v106 = vpack.c.b16 %v95, %v94
  %v107 = vpack.c.b16 %v97, %v96
  %v108 = vpack.c.b16 %v99, %v98
  %v109 = vpack.c.b16 %v101, %v100
  %v134 = vunpack.c.l.b16 %v54
  %v135 = vunpack.c.l.b16 %v55
  %v136 = vunpack.c.l.b16 %v56
  %v137 = vunpack.c.l.b16 %v57
  %v138 = vunpack.c.l.b16 %v58
  %v139 = vunpack.c.l.b16 %v59
  %v140 = vunpack.c.l.b16 %v60
  %v141 = vunpack.c.l.b16 %v61
  %v142 = vunpack.c.l.b16 %v62
  %v143 = vunpack.c.l.b16 %v63
  %v144 = vunpack.c.l.b16 %v64
  %v145 = vunpack.c.l.b16 %v65
  %v146 = vunpack.c.l.b16 %v66
  %v147 = vunpack.c.l.b16 %v67
  %v148 = vunpack.c.l.b16 %v68
  %v149 = vunpack.c.l.b16 %v69
  %v150 = vpack.c.b16 %v135, %v134
  %v151 = vpack.c.b16 %v137, %v136
  %v152 = vpack.c.b16 %v139, %v138
  %v153 = vpack.c.b16 %v141, %v140
  %v154 = vpack.c.b16 %v143, %v142
  %v155 = vpack.c.b16 %v145, %v144
  %v156 = vpack.c.b16 %v147, %v146
  %v157 = vpack.c.b16 %v149, %v148
  %166 = vmatprep.subr.bf16.mxu0 0
  %167 = vmatpush1.bf16.msra.mxu0 %v150
  %168 = vmatprep.subr.bf16.mxu0 0
  %169 = vmatpush1.bf16.msra.mxu0 %v151
  %170 = vmatprep.subr.bf16.mxu0 0
  %171 = vmatpush1.bf16.msra.mxu0 %v152
  %172 = vmatprep.subr.bf16.mxu0 0
  %173 = vmatpush1.bf16.msra.mxu0 %v153
  %174 = vmatprep.subr.bf16.mxu0 0
  %175 = vmatpush1.bf16.msra.mxu0 %v154
  %176 = vmatprep.subr.bf16.mxu0 0
  %177 = vmatpush1.bf16.msra.mxu0 %v155
  %178 = vmatprep.subr.bf16.mxu0 0
  %179 = vmatpush1.bf16.msra.mxu0 %v156
  %180 = vmatprep.subr.bf16.mxu0 0
  %181 = vmatpush1.bf16.msra.mxu0 %v157
  %182 = vmatprep.subr.bf16.mxu0 0
  %183 = vmatpush1.bf16.msra.mxu0 0
  %184 = vmatprep.subr.bf16.mxu0 0
  %185 = vmatpush1.bf16.msra.mxu0 0
  %186 = vmatprep.subr.bf16.mxu0 0
  %187 = vmatpush1.bf16.msra.mxu0 0
  %188 = vmatprep.subr.bf16.mxu0 0
  %189 = vmatpush1.bf16.msra.mxu0 0
  %190 = vmatprep.subr.bf16.mxu0 0
  %191 = vmatpush1.bf16.msra.mxu0 0
  %192 = vmatprep.subr.bf16.mxu0 0
  %193 = vmatpush1.bf16.msra.mxu0 0
  %194 = vmatprep.subr.bf16.mxu0 0
  %195 = vmatpush1.bf16.msra.mxu0 0
  %196 = vmatprep.subr.bf16.mxu0 0
  %197 = vmatpush1.bf16.msra.mxu0 0
  %198 = vmatprep.mubr.bf16.mxu0 0
  %199 = vmatmul.mubr.bf16.gmra.mrb[0].mxu0 %v102
  %v200 = vpop.f32.mrb[0].mxu0
  %v201 = vadd.f32 0.0, %v200
  %v202 = vpop.f32.mrb[0].mxu0
  %v203 = vpop.f32.mrb[0].mxu0
  %v204 = vadd.f32 0.0, %v203
  %v205 = vpop.f32.mrb[0].mxu0
  %206 = vmatprep.mubr.bf16.mxu0 0
  %207 = vmatmul.mubr.bf16.gmra.mrb[0].mxu0 %v103
  %v208 = vpop.f32.mrb[0].mxu0
  %v209 = vadd.f32 0.0, %v208
  %v210 = vpop.f32.mrb[0].mxu0
  %v211 = vpop.f32.mrb[0].mxu0
  %v212 = vadd.f32 0.0, %v211
  %v213 = vpop.f32.mrb[0].mxu0
  %214 = vmatprep.mubr.bf16.mxu0 0
  %215 = vmatmul.mubr.bf16.gmra.mrb[0].mxu0 %v104
  %v216 = vpop.f32.mrb[0].mxu0
  %v217 = vadd.f32 0.0, %v216
  %v218 = vpop.f32.mrb[0].mxu0
  %v219 = vpop.f32.mrb[0].mxu0
  %v220 = vadd.f32 0.0, %v219
  %v221 = vpop.f32.mrb[0].mxu0
  %222 = vmatprep.mubr.bf16.mxu0 0
  %223 = vmatmul.mubr.bf16.gmra.mrb[0].mxu0 %v105
  %v224 = vpop.f32.mrb[0].mxu0
  %v225 = vadd.f32 0.0, %v224
  %v226 = vpop.f32.mrb[0].mxu0
  %v227 = vpop.f32.mrb[0].mxu0
  %v228 = vadd.f32 0.0, %v227
  %v229 = vpop.f32.mrb[0].mxu0
  %230 = vmatprep.mubr.bf16.mxu0 0
  %231 = vmatmul.mubr.bf16.gmra.mrb[0].mxu0 %v106
  %v232 = vpop.f32.mrb[0].mxu0
  %v233 = vadd.f32 0.0, %v232
  %v234 = vpop.f32.mrb[0].mxu0
  %v235 = vpop.f32.mrb[0].mxu0
  %v236 = vadd.f32 0.0, %v235
  %v237 = vpop.f32.mrb[0].mxu0
  %238 = vmatprep.mubr.bf16.mxu0 0
  %239 = vmatmul.mubr.bf16.gmra.mrb[0].mxu0 %v107
  %v240 = vpop.f32.mrb[0].mxu0
  %v241 = vadd.f32 0.0, %v240
  %v242 = vpop.f32.mrb[0].mxu0
  %v243 = vpop.f32.mrb[0].mxu0
  %v244 = vadd.f32 0.0, %v243
  %v245 = vpop.f32.mrb[0].mxu0
  %246 = vmatprep.mubr.bf16.mxu0 0
  %247 = vmatmul.mubr.bf16.gmra.mrb[0].mxu0 %v108
  %v248 = vpop.f32.mrb[0].mxu0
  %v249 = vadd.f32 0.0, %v248
  %v250 = vpop.f32.mrb[0].mxu0
  %v251 = vpop.f32.mrb[0].mxu0
  %v252 = vadd.f32 0.0, %v251
  %v253 = vpop.f32.mrb[0].mxu0
  %254 = vmatprep.mubr.bf16.mxu0 0
  %255 = vmatmul.mubr.bf16.gmra.mrb[0].mxu0 %v109
  %v256 = vpop.f32.mrb[0].mxu0
  %v257 = vadd.f32 0.0, %v256
  %v258 = vpop.f32.mrb[0].mxu0
  %v259 = vpop.f32.mrb[0].mxu0
  %v260 = vadd.f32 0.0, %v259
  %v261 = vpop.f32.mrb[0].mxu0
  %262 = vdwg.mxu0
  %v263 = vpack.c.bf16 %v204, %v201
  %v264 = vpack.c.bf16 %v212, %v209
  %v265 = vpack.c.bf16 %v220, %v217
  %v266 = vpack.c.bf16 %v228, %v225
  %v267 = vpack.c.bf16 %v236, %v233
  %v268 = vpack.c.bf16 %v244, %v241
  %v269 = vpack.c.bf16 %v252, %v249
  %v270 = vpack.c.bf16 %v260, %v257
  %p271 = scmp.eq.s32.totalorder 0, 0
  // Predicated region
  $region22: #{graph_classifier_forward.2} parent=0 // pred_check
    %p272 = pneg %p271
  $region23: #{graph_classifier_forward.2} parent=0 // pred_check_branch
    %274 = sbr.rel (%p272) target = $region25
  $region24: #{graph_classifier_forward.2} parent=0 // pred_region
    %275 = vst [vmem:[#allocation3] sm:$0xff] %v263
    %276 = vst [vmem:[#allocation3 + $0x8] sm:$0xff] %v264
    %277 = vst [vmem:[#allocation3 + $0x10] sm:$0xff] %v265
    %278 = vst [vmem:[#allocation3 + $0x18] sm:$0xff] %v266
    %279 = vst [vmem:[#allocation3 + $0x20] sm:$0xff] %v267
    %280 = vst [vmem:[#allocation3 + $0x28] sm:$0xff] %v268
    %281 = vst [vmem:[#allocation3 + $0x30] sm:$0xff] %v269
    %282 = vst [vmem:[#allocation3 + $0x38] sm:$0xff] %v270
  $region25: #{graph_classifier_forward.2} parent=0 // pred_fallthru
    _
  %v283 = vld [vmem:[#allocation2] sm:$0xff]
  %v284 = vld [vmem:[#allocation2 + $0x8] sm:$0xff]
  %v285 = vld [vmem:[#allocation2 + $0x10] sm:$0xff]
  %v286 = vld [vmem:[#allocation2 + $0x18] sm:$0xff]
  %v287 = vld [vmem:[#allocation2 + $0x20] sm:$0xff]
  %v288 = vld [vmem:[#allocation2 + $0x28] sm:$0xff]
  %v289 = vld [vmem:[#allocation2 + $0x30] sm:$0xff]
  %v290 = vld [vmem:[#allocation2 + $0x38] sm:$0xff]
  %v291 = vld [vmem:[#allocation2 + $0x40] sm:$0xff]
  %v292 = vld [vmem:[#allocation2 + $0x48] sm:$0xff]
  %v293 = vld [vmem:[#allocation2 + $0x50] sm:$0xff]
  %v294 = vld [vmem:[#allocation2 + $0x58] sm:$0xff]
  %v295 = vld [vmem:[#allocation2 + $0x60] sm:$0xff]
  %v296 = vld [vmem:[#allocation2 + $0x68] sm:$0xff]
  %v297 = vld [vmem:[#allocation2 + $0x70] sm:$0xff]
  %v298 = vld [vmem:[#allocation2 + $0x78] sm:$0xff]
  %v299 = vld [vmem:[%s0] sm:$0xf]
  %v300 = vld [vmem:[%s0 + $0x4] sm:$0xf]
  %v301 = vld [vmem:[%s0 + $0x8] sm:$0xf]
  %v302 = vld [vmem:[%s0 + $0xc] sm:$0xf]
  %v303 = vld [vmem:[%s0 + $0x10] sm:$0xf]
  %v304 = vld [vmem:[%s0 + $0x14] sm:$0xf]
  %v305 = vld [vmem:[%s0 + $0x18] sm:$0xf]
  %v306 = vld [vmem:[%s0 + $0x1c] sm:$0xf]
  %v307 = vld [vmem:[%s0 + $0x20] sm:$0xf]
  %v308 = vld [vmem:[%s0 + $0x24] sm:$0xf]
  %v309 = vld [vmem:[%s0 + $0x28] sm:$0xf]
  %v310 = vld [vmem:[%s0 + $0x2c] sm:$0xf]
  %v311 = vld [vmem:[%s0 + $0x30] sm:$0xf]
  %v312 = vld [vmem:[%s0 + $0x34] sm:$0xf]
  %v313 = vld [vmem:[%s0 + $0x38] sm:$0xf]
  %v314 = vld [vmem:[%s0 + $0x3c] sm:$0xf]
  %v331 = vunpack.c.l.b16 %v299
  %v332 = vunpack.c.l.b16 %v300
  %v333 = vunpack.c.l.b16 %v301
  %v334 = vunpack.c.l.b16 %v302
  %v335 = vunpack.c.l.b16 %v303
  %v336 = vunpack.c.l.b16 %v304
  %v337 = vunpack.c.l.b16 %v305
  %v338 = vunpack.c.l.b16 %v306
  %v339 = vunpack.c.l.b16 %v307
  %v340 = vunpack.c.l.b16 %v308
  %v341 = vunpack.c.l.b16 %v309
  %v342 = vunpack.c.l.b16 %v310
  %v343 = vunpack.c.l.b16 %v311
  %v344 = vunpack.c.l.b16 %v312
  %v345 = vunpack.c.l.b16 %v313
  %v346 = vunpack.c.l.b16 %v314
  %v347 = vpack.c.b16 %v332, %v331
  %v348 = vpack.c.b16 %v334, %v333
  %v349 = vpack.c.b16 %v336, %v335
  %v350 = vpack.c.b16 %v338, %v337
  %v351 = vpack.c.b16 %v340, %v339
  %v352 = vpack.c.b16 %v342, %v341
  %v353 = vpack.c.b16 %v344, %v343
  %v354 = vpack.c.b16 %v346, %v345
  %363 = vmatprep.subr.bf16.mxu0 0
  %364 = vmatpush1.bf16.msra.mxu0 %v263
  %365 = vmatprep.subr.bf16.mxu0 0
  %366 = vmatpush1.bf16.msra.mxu0 %v264
  %367 = vmatprep.subr.bf16.mxu0 0
  %368 = vmatpush1.bf16.msra.mxu0 %v265
  %369 = vmatprep.subr.bf16.mxu0 0
  %370 = vmatpush1.bf16.msra.mxu0 %v266
  %371 = vmatprep.subr.bf16.mxu0 0
  %372 = vmatpush1.bf16.msra.mxu0 %v267
  %373 = vmatprep.subr.bf16.mxu0 0
  %374 = vmatpush1.bf16.msra.mxu0 %v268
  %375 = vmatprep.subr.bf16.mxu0 0
  %376 = vmatpush1.bf16.msra.mxu0 %v269
  %377 = vmatprep.subr.bf16.mxu0 0
  %378 = vmatpush1.bf16.msra.mxu0 %v270
  %379 = vmatprep.subr.bf16.mxu0 0
  %380 = vmatpush1.bf16.msra.mxu0 0
  %381 = vmatprep.subr.bf16.mxu0 0
  %382 = vmatpush1.bf16.msra.mxu0 0
  %383 = vmatprep.subr.bf16.mxu0 0
  %384 = vmatpush1.bf16.msra.mxu0 0
  %385 = vmatprep.subr.bf16.mxu0 0
  %386 = vmatpush1.bf16.msra.mxu0 0
  %387 = vmatprep.subr.bf16.mxu0 0
  %388 = vmatpush1.bf16.msra.mxu0 0
  %389 = vmatprep.subr.bf16.mxu0 0
  %390 = vmatpush1.bf16.msra.mxu0 0
  %391 = vmatprep.subr.bf16.mxu0 0
  %392 = vmatpush1.bf16.msra.mxu0 0
  %393 = vmatprep.subr.bf16.mxu0 0
  %394 = vmatpush1.bf16.msra.mxu0 0
  %395 = vmatprep.mubr.bf16.mxu0 0
  %396 = vmatmul.mubr.bf16.gmra.mrb[0].mxu0 %v347
  %v397 = vpop.f32.mrb[0].mxu0
  %v398 = vadd.f32 0.0, %v397
  %v399 = vpop.f32.mrb[0].mxu0
  %v400 = vpop.f32.mrb[0].mxu0
  %v401 = vadd.f32 0.0, %v400
  %v402 = vpop.f32.mrb[0].mxu0
  %403 = vmatprep.mubr.bf16.mxu0 0
  %404 = vmatmul.mubr.bf16.gmra.mrb[0].mxu0 %v348
  %v405 = vpop.f32.mrb[0].mxu0
  %v406 = vadd.f32 0.0, %v405
  %v407 = vpop.f32.mrb[0].mxu0
  %v408 = vpop.f32.mrb[0].mxu0
  %v409 = vadd.f32 0.0, %v408
  %v410 = vpop.f32.mrb[0].mxu0
  %411 = vmatprep.mubr.bf16.mxu0 0
  %412 = vmatmul.mubr.bf16.gmra.mrb[0].mxu0 %v349
  %v413 = vpop.f32.mrb[0].mxu0
  %v414 = vadd.f32 0.0, %v413
  %v415 = vpop.f32.mrb[0].mxu0
  %v416 = vpop.f32.mrb[0].mxu0
  %v417 = vadd.f32 0.0, %v416
  %v418 = vpop.f32.mrb[0].mxu0
  %419 = vmatprep.mubr.bf16.mxu0 0
  %420 = vmatmul.mubr.bf16.gmra.mrb[0].mxu0 %v350
  %v421 = vpop.f32.mrb[0].mxu0
  %v422 = vadd.f32 0.0, %v421
  %v423 = vpop.f32.mrb[0].mxu0
  %v424 = vpop.f32.mrb[0].mxu0
  %v425 = vadd.f32 0.0, %v424
  %v426 = vpop.f32.mrb[0].mxu0
  %427 = vmatprep.mubr.bf16.mxu0 0
  %428 = vmatmul.mubr.bf16.gmra.mrb[0].mxu0 %v351
  %v429 = vpop.f32.mrb[0].mxu0
  %v430 = vadd.f32 0.0, %v429
  %v431 = vpop.f32.mrb[0].mxu0
  %v432 = vpop.f32.mrb[0].mxu0
  %v433 = vadd.f32 0.0, %v432
  %v434 = vpop.f32.mrb[0].mxu0
  %435 = vmatprep.mubr.bf16.mxu0 0
  %436 = vmatmul.mubr.bf16.gmra.mrb[0].mxu0 %v352
  %v437 = vpop.f32.mrb[0].mxu0
  %v438 = vadd.f32 0.0, %v437
  %v439 = vpop.f32.mrb[0].mxu0
  %v440 = vpop.f32.mrb[0].mxu0
  %v441 = vadd.f32 0.0, %v440
  %v442 = vpop.f32.mrb[0].mxu0
  %443 = vmatprep.mubr.bf16.mxu0 0
  %444 = vmatmul.mubr.bf16.gmra.mrb[0].mxu0 %v353
  %v445 = vpop.f32.mrb[0].mxu0
  %v446 = vadd.f32 0.0, %v445
  %v447 = vpop.f32.mrb[0].mxu0
  %v448 = vpop.f32.mrb[0].mxu0
  %v449 = vadd.f32 0.0, %v448
  %v450 = vpop.f32.mrb[0].mxu0
  %451 = vmatprep.mubr.bf16.mxu0 0
  %452 = vmatmul.mubr.bf16.gmra.mrb[0].mxu0 %v354
  %v453 = vpop.f32.mrb[0].mxu0
  %v454 = vadd.f32 0.0, %v453
  %v455 = vpop.f32.mrb[0].mxu0
  %v456 = vpop.f32.mrb[0].mxu0
  %v457 = vadd.f32 0.0, %v456
  %v458 = vpop.f32.mrb[0].mxu0
  %459 = vdwg.mxu0
  %v460 = vadd.f32 %v283, %v398
  %v461 = vadd.f32 %v284, %v401
  %v462 = vadd.f32 %v285, %v406
  %v463 = vadd.f32 %v286, %v409
  %v464 = vadd.f32 %v287, %v414
  %v465 = vadd.f32 %v288, %v417
  %v466 = vadd.f32 %v289, %v422
  %v467 = vadd.f32 %v290, %v425
  %v468 = vadd.f32 %v291, %v430
  %v469 = vadd.f32 %v292, %v433
  %v470 = vadd.f32 %v293, %v438
  %v471 = vadd.f32 %v294, %v441
  %v472 = vadd.f32 %v295, %v446
  %v473 = vadd.f32 %v296, %v449
  %v474 = vadd.f32 %v297, %v454
  %v475 = vadd.f32 %v298, %v457
  %476 = vst [vmem:[#allocation2] sm:$0xff] %v460
  %477 = vst [vmem:[#allocation2 + $0x8] sm:$0xff] %v461
  %478 = vst [vmem:[#allocation2 + $0x10] sm:$0xff] %v462
  %479 = vst [vmem:[#allocation2 + $0x18] sm:$0xff] %v463
  %480 = vst [vmem:[#allocation2 + $0x20] sm:$0xff] %v464
  %481 = vst [vmem:[#allocation2 + $0x28] sm:$0xff] %v465
  %482 = vst [vmem:[#allocation2 + $0x30] sm:$0xff] %v466
  %483 = vst [vmem:[#allocation2 + $0x38] sm:$0xff] %v467
  %484 = vst [vmem:[#allocation2 + $0x40] sm:$0xff] %v468
  %485 = vst [vmem:[#allocation2 + $0x48] sm:$0xff] %v469
  %486 = vst [vmem:[#allocation2 + $0x50] sm:$0xff] %v470
  %487 = vst [vmem:[#allocation2 + $0x58] sm:$0xff] %v471
  %488 = vst [vmem:[#allocation2 + $0x60] sm:$0xff] %v472
  %489 = vst [vmem:[#allocation2 + $0x68] sm:$0xff] %v473
  %490 = vst [vmem:[#allocation2 + $0x70] sm:$0xff] %v474
  %491 = vst [vmem:[#allocation2 + $0x78] sm:$0xff] %v475
  // Predicated region
  $region26: #{graph_classifier_forward.2} parent=0 // pred_check
    %p492 = pneg %p18
  $region27: #{graph_classifier_forward.2} parent=0 // pred_check_branch
    %494 = sbr.rel (%p492) target = $region29
  $region28: #{graph_classifier_forward.2} parent=0 // pred_region
    %v495 = vld [vmem:[#allocation3] sm:$0xff]
    %v496 = vld [vmem:[#allocation3 + $0x8] sm:$0xff]
    %v497 = vld [vmem:[#allocation3 + $0x10] sm:$0xff]
    %v498 = vld [vmem:[#allocation3 + $0x18] sm:$0xff]
    %v499 = vld [vmem:[#allocation3 + $0x20] sm:$0xff]
    %v500 = vld [vmem:[#allocation3 + $0x28] sm:$0xff]
    %v501 = vld [vmem:[#allocation3 + $0x30] sm:$0xff]
    %v502 = vld [vmem:[#allocation3 + $0x38] sm:$0xff]
    %v503 = vld [vmem:[#allocation2] sm:$0xff]
    %v504 = vld [vmem:[#allocation2 + $0x8] sm:$0xff]
    %v505 = vld [vmem:[#allocation2 + $0x10] sm:$0xff]
    %v506 = vld [vmem:[#allocation2 + $0x18] sm:$0xff]
    %v507 = vld [vmem:[#allocation2 + $0x20] sm:$0xff]
    %v508 = vld [vmem:[#allocation2 + $0x28] sm:$0xff]
    %v509 = vld [vmem:[#allocation2 + $0x30] sm:$0xff]
    %v510 = vld [vmem:[#allocation2 + $0x38] sm:$0xff]
    %v511 = vld [vmem:[#allocation2 + $0x40] sm:$0xff]
    %v512 = vld [vmem:[#allocation2 + $0x48] sm:$0xff]
    %v513 = vld [vmem:[#allocation2 + $0x50] sm:$0xff]
    %v514 = vld [vmem:[#allocation2 + $0x58] sm:$0xff]
    %v515 = vld [vmem:[#allocation2 + $0x60] sm:$0xff]
    %v516 = vld [vmem:[#allocation2 + $0x68] sm:$0xff]
    %v517 = vld [vmem:[#allocation2 + $0x70] sm:$0xff]
    %v518 = vld [vmem:[#allocation2 + $0x78] sm:$0xff]
    %v519 = vpack.c.bf16 %v504, %v503
    %v520 = vpack.c.bf16 %v506, %v505
    %v521 = vpack.c.bf16 %v508, %v507
    %v522 = vpack.c.bf16 %v510, %v509
    %v523 = vpack.c.bf16 %v512, %v511
    %v524 = vpack.c.bf16 %v514, %v513
    %v525 = vpack.c.bf16 %v516, %v515
    %v526 = vpack.c.bf16 %v518, %v517
    %v527 = vld [vmem:[%s3] sm:$0xf]
    %v528 = vld [vmem:[%s3 + $0x4] sm:$0xf]
    %v529 = vld [vmem:[%s3 + $0x8] sm:$0xf]
    %v530 = vld [vmem:[%s3 + $0xc] sm:$0xf]
    %v531 = vld [vmem:[%s3 + $0x10] sm:$0xf]
    %v532 = vld [vmem:[%s3 + $0x14] sm:$0xf]
    %v533 = vld [vmem:[%s3 + $0x18] sm:$0xf]
    %v534 = vld [vmem:[%s3 + $0x1c] sm:$0xf]
    %v535 = vld [vmem:[%s3 + $0x20] sm:$0xf]
    %v536 = vld [vmem:[%s3 + $0x24] sm:$0xf]
    %v537 = vld [vmem:[%s3 + $0x28] sm:$0xf]
    %v538 = vld [vmem:[%s3 + $0x2c] sm:$0xf]
    %v539 = vld [vmem:[%s3 + $0x30] sm:$0xf]
    %v540 = vld [vmem:[%s3 + $0x34] sm:$0xf]
    %v541 = vld [vmem:[%s3 + $0x38] sm:$0xf]
    %v542 = vld [vmem:[%s3 + $0x3c] sm:$0xf]
    %v543 = vld [vmem:[%s3 + $0x40] sm:$0xf]
    %v544 = vld [vmem:[%s3 + $0x44] sm:$0xf]
    %v545 = vld [vmem:[%s3 + $0x48] sm:$0xf]
    %v546 = vld [vmem:[%s3 + $0x4c] sm:$0xf]
    %v547 = vld [vmem:[%s3 + $0x50] sm:$0xf]
    %v548 = vld [vmem:[%s3 + $0x54] sm:$0xf]
    %v549 = vld [vmem:[%s3 + $0x58] sm:$0xf]
    %v550 = vld [vmem:[%s3 + $0x5c] sm:$0xf]
    %v551 = vld [vmem:[%s3 + $0x60] sm:$0xf]
    %v552 = vld [vmem:[%s3 + $0x64] sm:$0xf]
    %v553 = vld [vmem:[%s3 + $0x68] sm:$0xf]
    %v554 = vld [vmem:[%s3 + $0x6c] sm:$0xf]
    %v555 = vld [vmem:[%s3 + $0x70] sm:$0xf]
    %v556 = vld [vmem:[%s3 + $0x74] sm:$0xf]
    %v557 = vld [vmem:[%s3 + $0x78] sm:$0xf]
    %v558 = vld [vmem:[%s3 + $0x7c] sm:$0xf]
    %v591 = vunpack.c.l.b16 %v527
    %v592 = vunpack.c.l.b16 %v528
    %v593 = vunpack.c.l.b16 %v529
    %v594 = vunpack.c.l.b16 %v530
    %v595 = vunpack.c.l.b16 %v531
    %v596 = vunpack.c.l.b16 %v532
    %v597 = vunpack.c.l.b16 %v533
    %v598 = vunpack.c.l.b16 %v534
    %v599 = vunpack.c.l.b16 %v535
    %v600 = vunpack.c.l.b16 %v536
    %v601 = vunpack.c.l.b16 %v537
    %v602 = vunpack.c.l.b16 %v538
    %v603 = vunpack.c.l.b16 %v539
    %v604 = vunpack.c.l.b16 %v540
    %v605 = vunpack.c.l.b16 %v541
    %v606 = vunpack.c.l.b16 %v542
    %v607 = vunpack.c.l.b16 %v543
    %v608 = vunpack.c.l.b16 %v544
    %v609 = vunpack.c.l.b16 %v545
    %v610 = vunpack.c.l.b16 %v546
    %v611 = vunpack.c.l.b16 %v547
    %v612 = vunpack.c.l.b16 %v548
    %v613 = vunpack.c.l.b16 %v549
    %v614 = vunpack.c.l.b16 %v550
    %v615 = vunpack.c.l.b16 %v551
    %v616 = vunpack.c.l.b16 %v552
    %v617 = vunpack.c.l.b16 %v553
    %v618 = vunpack.c.l.b16 %v554
    %v619 = vunpack.c.l.b16 %v555
    %v620 = vunpack.c.l.b16 %v556
    %v621 = vunpack.c.l.b16 %v557
    %v622 = vunpack.c.l.b16 %v558
    %v623 = vpack.c.b16 %v592, %v591
    %v624 = vpack.c.b16 %v594, %v593
    %v625 = vpack.c.b16 %v596, %v595
    %v626 = vpack.c.b16 %v598, %v597
    %v627 = vpack.c.b16 %v600, %v599
    %v628 = vpack.c.b16 %v602, %v601
    %v629 = vpack.c.b16 %v604, %v603
    %v630 = vpack.c.b16 %v606, %v605
    %v631 = vpack.c.b16 %v608, %v607
    %v632 = vpack.c.b16 %v610, %v609
    %v633 = vpack.c.b16 %v612, %v611
    %v634 = vpack.c.b16 %v614, %v613
    %v635 = vpack.c.b16 %v616, %v615
    %v636 = vpack.c.b16 %v618, %v617
    %v637 = vpack.c.b16 %v620, %v619
    %v638 = vpack.c.b16 %v622, %v621
    %655 = vmatprep.subr.bf16.mxu0 0
    %656 = vmatpush1.bf16.msra.mxu0 %v623
    %657 = vmatprep.subr.bf16.mxu0 0
    %658 = vmatpush1.bf16.msra.mxu0 %v624
    %659 = vmatprep.subr.bf16.mxu0 0
    %660 = vmatpush1.bf16.msra.mxu0 %v625
    %661 = vmatprep.subr.bf16.mxu0 0
    %662 = vmatpush1.bf16.msra.mxu0 %v626
    %663 = vmatprep.subr.bf16.mxu0 0
    %664 = vmatpush1.bf16.msra.mxu0 %v627
    %665 = vmatprep.subr.bf16.mxu0 0
    %666 = vmatpush1.bf16.msra.mxu0 %v628
    %667 = vmatprep.subr.bf16.mxu0 0
    %668 = vmatpush1.bf16.msra.mxu0 %v629
    %669 = vmatprep.subr.bf16.mxu0 0
    %670 = vmatpush1.bf16.msra.mxu0 %v630
    %671 = vmatprep.subr.bf16.mxu0 0
    %672 = vmatpush1.bf16.msra.mxu0 %v631
    %673 = vmatprep.subr.bf16.mxu0 0
    %674 = vmatpush1.bf16.msra.mxu0 %v632
    %675 = vmatprep.subr.bf16.mxu0 0
    %676 = vmatpush1.bf16.msra.mxu0 %v633
    %677 = vmatprep.subr.bf16.mxu0 0
    %678 = vmatpush1.bf16.msra.mxu0 %v634
    %679 = vmatprep.subr.bf16.mxu0 0
    %680 = vmatpush1.bf16.msra.mxu0 %v635
    %681 = vmatprep.subr.bf16.mxu0 0
    %682 = vmatpush1.bf16.msra.mxu0 %v636
    %683 = vmatprep.subr.bf16.mxu0 0
    %684 = vmatpush1.bf16.msra.mxu0 %v637
    %685 = vmatprep.subr.bf16.mxu0 0
    %686 = vmatpush1.bf16.msra.mxu0 %v638
    %687 = vmatprep.mubr.bf16.mxu0 %v519
    %688 = vmatmul.mubr.bf16.gmra.mrb[0].mxu0 %v495
    %v689 = vpop.f32.mrb[0].mxu0
    %v690 = vadd.f32 0.0, %v689
    %v691 = vpop.f32.mrb[0].mxu0
    %v692 = vpop.f32.mrb[0].mxu0
    %v693 = vadd.f32 0.0, %v692
    %v694 = vpop.f32.mrb[0].mxu0
    %695 = vmatprep.mubr.bf16.mxu0 %v520
    %696 = vmatmul.mubr.bf16.gmra.mrb[0].mxu0 %v496
    %v697 = vpop.f32.mrb[0].mxu0
    %v698 = vadd.f32 0.0, %v697
    %v699 = vpop.f32.mrb[0].mxu0
    %v700 = vpop.f32.mrb[0].mxu0
    %v701 = vadd.f32 0.0, %v700
    %v702 = vpop.f32.mrb[0].mxu0
    %703 = vmatprep.mubr.bf16.mxu0 %v521
    %704 = vmatmul.mubr.bf16.gmra.mrb[0].mxu0 %v497
    %v705 = vpop.f32.mrb[0].mxu0
    %v706 = vadd.f32 0.0, %v705
    %v707 = vpop.f32.mrb[0].mxu0
    %v708 = vpop.f32.mrb[0].mxu0
    %v709 = vadd.f32 0.0, %v708
    %v710 = vpop.f32.mrb[0].mxu0
    %711 = vmatprep.mubr.bf16.mxu0 %v522
    %712 = vmatmul.mubr.bf16.gmra.mrb[0].mxu0 %v498
    %v713 = vpop.f32.mrb[0].mxu0
    %v714 = vadd.f32 0.0, %v713
    %v715 = vpop.f32.mrb[0].mxu0
    %v716 = vpop.f32.mrb[0].mxu0
    %v717 = vadd.f32 0.0, %v716
    %v718 = vpop.f32.mrb[0].mxu0
    %719 = vmatprep.mubr.bf16.mxu0 %v523
    %720 = vmatmul.mubr.bf16.gmra.mrb[0].mxu0 %v499
    %v721 = vpop.f32.mrb[0].mxu0
    %v722 = vadd.f32 0.0, %v721
    %v723 = vpop.f32.mrb[0].mxu0
    %v724 = vpop.f32.mrb[0].mxu0
    %v725 = vadd.f32 0.0, %v724
    %v726 = vpop.f32.mrb[0].mxu0
    %727 = vmatprep.mubr.bf16.mxu0 %v524
    %728 = vmatmul.mubr.bf16.gmra.mrb[0].mxu0 %v500
    %v729 = vpop.f32.mrb[0].mxu0
    %v730 = vadd.f32 0.0, %v729
    %v731 = vpop.f32.mrb[0].mxu0
    %v732 = vpop.f32.mrb[0].mxu0
    %v733 = vadd.f32 0.0, %v732
    %v734 = vpop.f32.mrb[0].mxu0
    %735 = vmatprep.mubr.bf16.mxu0 %v525
    %736 = vmatmul.mubr.bf16.gmra.mrb[0].mxu0 %v501
    %v737 = vpop.f32.mrb[0].mxu0
    %v738 = vadd.f32 0.0, %v737
    %v739 = vpop.f32.mrb[0].mxu0
    %v740 = vpop.f32.mrb[0].mxu0
    %v741 = vadd.f32 0.0, %v740
    %v742 = vpop.f32.mrb[0].mxu0
    %743 = vmatprep.mubr.bf16.mxu0 %v526
    %744 = vmatmul.mubr.bf16.gmra.mrb[0].mxu0 %v502
    %v745 = vpop.f32.mrb[0].mxu0
    %v746 = vadd.f32 0.0, %v745
    %v747 = vpop.f32.mrb[0].mxu0
    %v748 = vpop.f32.mrb[0].mxu0
    %v749 = vadd.f32 0.0, %v748
    %v750 = vpop.f32.mrb[0].mxu0
    %751 = vdwg.mxu0
    %v752 = vmul.f32 %v690, 0.5
    %v753 = vmul.f32 %v693, 0.5
    %v754 = vmul.f32 %v698, 0.5
    %v755 = vmul.f32 %v701, 0.5
    %v756 = vmul.f32 %v706, 0.5
    %v757 = vmul.f32 %v709, 0.5
    %v758 = vmul.f32 %v714, 0.5
    %v759 = vmul.f32 %v717, 0.5
    %v760 = vmul.f32 %v722, 0.5
    %v761 = vmul.f32 %v725, 0.5
    %v762 = vmul.f32 %v730, 0.5
    %v763 = vmul.f32 %v733, 0.5
    %v764 = vmul.f32 %v738, 0.5
    %v765 = vmul.f32 %v741, 0.5
    %v766 = vmul.f32 %v746, 0.5
    %v767 = vmul.f32 %v749, 0.5
    %v768 = vmul.f32 %v690, 0.70710677
    %v769 = vmul.f32 %v693, 0.70710677
    %v770 = vmul.f32 %v698, 0.70710677
    %v771 = vmul.f32 %v701, 0.70710677
    %v772 = vmul.f32 %v706, 0.70710677
    %v773 = vmul.f32 %v709, 0.70710677
    %v774 = vmul.f32 %v714, 0.70710677
    %v775 = vmul.f32 %v717, 0.70710677
    %v776 = vmul.f32 %v722, 0.70710677
    %v777 = vmul.f32 %v725, 0.70710677
    %v778 = vmul.f32 %v730, 0.70710677
    %v779 = vmul.f32 %v733, 0.70710677
    %v780 = vmul.f32 %v738, 0.70710677
    %v781 = vmul.f32 %v741, 0.70710677
    %v782 = vmul.f32 %v746, 0.70710677
    %v783 = vmul.f32 %v749, 0.70710677
    %v784 = verf.f32.pop %v768
    %v785 = verf.f32.pop %v769
    %v786 = verf.f32.pop %v770
    %v787 = verf.f32.pop %v771
    %v788 = verf.f32.pop %v772
    %v789 = verf.f32.pop %v773
    %v790 = verf.f32.pop %v774
    %v791 = verf.f32.pop %v775
    %v792 = verf.f32.pop %v776
    %v793 = verf.f32.pop %v777
    %v794 = verf.f32.pop %v778
    %v795 = verf.f32.pop %v779
    %v796 = verf.f32.pop %v780
    %v797 = verf.f32.pop %v781
    %v798 = verf.f32.pop %v782
    %v799 = verf.f32.pop %v783
    %v800 = vadd.f32 %v784, 1.0
    %v801 = vadd.f32 %v785, 1.0
    %v802 = vadd.f32 %v786, 1.0
    %v803 = vadd.f32 %v787, 1.0
    %v804 = vadd.f32 %v788, 1.0
    %v805 = vadd.f32 %v789, 1.0
    %v806 = vadd.f32 %v790, 1.0
    %v807 = vadd.f32 %v791, 1.0
    %v808 = vadd.f32 %v792, 1.0
    %v809 = vadd.f32 %v793, 1.0
    %v810 = vadd.f32 %v794, 1.0
    %v811 = vadd.f32 %v795, 1.0
    %v812 = vadd.f32 %v796, 1.0
    %v813 = vadd.f32 %v797, 1.0
    %v814 = vadd.f32 %v798, 1.0
    %v815 = vadd.f32 %v799, 1.0
    %v816 = vmul.f32 %v752, %v800
    %v817 = vmul.f32 %v753, %v801
    %v818 = vmul.f32 %v754, %v802
    %v819 = vmul.f32 %v755, %v803
    %v820 = vmul.f32 %v756, %v804
    %v821 = vmul.f32 %v757, %v805
    %v822 = vmul.f32 %v758, %v806
    %v823 = vmul.f32 %v759, %v807
    %v824 = vmul.f32 %v760, %v808
    %v825 = vmul.f32 %v761, %v809
    %v826 = vmul.f32 %v762, %v810
    %v827 = vmul.f32 %v763, %v811
    %v828 = vmul.f32 %v764, %v812
    %v829 = vmul.f32 %v765, %v813
    %v830 = vmul.f32 %v766, %v814
    %v831 = vmul.f32 %v767, %v815
    %v832 = vpack.c.bf16 %v817, %v816
    %v833 = vpack.c.bf16 %v819, %v818
    %v834 = vpack.c.bf16 %v821, %v820
    %v835 = vpack.c.bf16 %v823, %v822
    %v836 = vpack.c.bf16 %v825, %v824
    %v837 = vpack.c.bf16 %v827, %v826
    %v838 = vpack.c.bf16 %v829, %v828
    %v839 = vpack.c.bf16 %v831, %v830
    %v848 = vunpack.c.l.b16 %v832
    %v849 = vunpack.c.h.b16 %v832
    %v850 = vunpack.c.l.b16 %v833
    %v851 = vunpack.c.h.b16 %v833
    %v852 = vunpack.c.l.b16 %v834
    %v853 = vunpack.c.h.b16 %v834
    %v854 = vunpack.c.l.b16 %v835
    %v855 = vunpack.c.h.b16 %v835
    %v856 = vunpack.c.l.b16 %v836
    %v857 = vunpack.c.h.b16 %v836
    %v858 = vunpack.c.l.b16 %v837
    %v859 = vunpack.c.h.b16 %v837
    %v860 = vunpack.c.l.b16 %v838
    %v861 = vunpack.c.h.b16 %v838
    %v862 = vunpack.c.l.b16 %v839
    %v863 = vunpack.c.h.b16 %v839
    %v864 = vpack.c.b16 %v848, %v848
    %v865 = vpack.c.b16 %v849, %v849
    %v866 = vpack.c.b16 %v850, %v850
    %v867 = vpack.c.b16 %v851, %v851
    %v868 = vpack.c.b16 %v852, %v852
    %v869 = vpack.c.b16 %v853, %v853
    %v870 = vpack.c.b16 %v854, %v854
    %v871 = vpack.c.b16 %v855, %v855
    %v872 = vpack.c.b16 %v856, %v856
    %v873 = vpack.c.b16 %v857, %v857
    %v874 = vpack.c.b16 %v858, %v858
    %v875 = vpack.c.b16 %v859, %v859
    %v876 = vpack.c.b16 %v860, %v860
    %v877 = vpack.c.b16 %v861, %v861
    %v878 = vpack.c.b16 %v862, %v862
    %v879 = vpack.c.b16 %v863, %v863
    %896 = vst [vmem:[%s4] sm:$0xf] %v864
    %897 = vst [vmem:[%s4 + $0x4] sm:$0xf] %v865
    %898 = vst [vmem:[%s4 + $0x8] sm:$0xf] %v866
    %899 = vst [vmem:[%s4 + $0xc] sm:$0xf] %v867
    %900 = vst [vmem:[%s4 + $0x10] sm:$0xf] %v868
    %901 = vst [vmem:[%s4 + $0x14] sm:$0xf] %v869
    %902 = vst [vmem:[%s4 + $0x18] sm:$0xf] %v870
    %903 = vst [vmem:[%s4 + $0x1c] sm:$0xf] %v871
    %904 = vst [vmem:[%s4 + $0x20] sm:$0xf] %v872
    %905 = vst [vmem:[%s4 + $0x24] sm:$0xf] %v873
    %906 = vst [vmem:[%s4 + $0x28] sm:$0xf] %v874
    %907 = vst [vmem:[%s4 + $0x2c] sm:$0xf] %v875
    %908 = vst [vmem:[%s4 + $0x30] sm:$0xf] %v876
    %909 = vst [vmem:[%s4 + $0x34] sm:$0xf] %v877
    %910 = vst [vmem:[%s4 + $0x38] sm:$0xf] %v878
    %911 = vst [vmem:[%s4 + $0x3c] sm:$0xf] %v879
  $region29: #{graph_classifier_forward.2} parent=0 // pred_fallthru
    _
  // Predicated region
  $region30: #{graph_classifier_forward.2} parent=0 // pred_check
    _
  $region31: #{graph_classifier_forward.2} parent=0 // pred_check_branch
    %913 = sbr.rel (0) target = $region33
  $region32: #{graph_classifier_forward.2} parent=0 // pred_region
    _
  $region33: #{graph_classifier_forward.2} parent=0 // pred_fallthru
    _
  // Predicated region
  $region34: #{graph_classifier_forward.2} parent=0 // pred_check
    _
  $region35: #{graph_classifier_forward.2} parent=0 // pred_check_branch
    %915 = sbr.rel (0) target = $region37
  $region36: #{graph_classifier_forward.2} parent=0 // pred_region
    _
  $region37: #{graph_classifier_forward.2} parent=0 // pred_fallthru
    _

</llo_original>
